<compile_context>
chip_gen: v6e
topology: v6e:2x2x1
jax: 0.10.0
libtpu: 0.0.40
codegen_flags: <defaults>
</compile_context>

<pallas_src>
import jax
import jax.numpy as jnp
import numpy as np
from jax import lax
from jax.experimental import pallas as pl
from jax.experimental.pallas import tpu as pltpu

B = 2
H = W = 16              # scaled-down spatial size
CIN = 1
COUT = 32
KH = KW = 3
HP, WP = H // 2, W // 2
HPAD = H + 2            # height-padded rows per image
NUM_CLASSES = 2
CWP = COUT * WP         # 256: one column-parity block of the packed conv output
FEAT = COUT * HP * WP   # 2048
KROWS = KH * W          # 48: merged banded-conv contraction dim (width pad folded into weights)
PREC = lax.Precision.HIGHEST


# ------------------------------ Pallas kernel ------------------------------ #
def fused_cnn_kernel(x_ref, m_ref, bc_ref, wfc_ref, bfc_ref, o_ref, xpad_ref):
    # Height-padded copy of both images in VMEM:
    #   scratch row b*HPAD + p :  p == 0 or H+1 -> zeros,  1 <= p <= H -> x[b, p-1, :]
    xpad_ref[...] = jnp.zeros_like(xpad_ref)
    for b in range(B):
        xpad_ref[pl.ds(b * HPAD + 1, H), :] = x_ref[b, 0]

    # Banded-conv lhs, built fully in-kernel with native sublane-strided loads.
    #   lhs row = ph*(B*HP) + b*HP + i    (conv output row = 2*i + ph)
    #   lhs col = kh*W + w_in             (width padding lives in the weight matrix)
    ph_blocks = []
    for ph in range(2):
        b_blocks = []
        for b in range(B):
            kh_blocks = [
                xpad_ref[pl.ds(b * HPAD + ph + kh, HP, stride=2), :]      # (HP, W)
                for kh in range(KH)
            ]
            b_blocks.append(jnp.concatenate(kh_blocks, axis=1))           # (HP, KROWS)
        ph_blocks.append(jnp.concatenate(b_blocks, axis=0))               # (B*HP, KROWS)
    lhs = jnp.concatenate(ph_blocks, axis=0)                              # (B*H, KROWS) = (32, 48)

    # Conv2d(1->32, k3, p1) as ONE banded matmul over both images, + bias + ReLU.
    #   m cols packed column-parity major: col = pw*CWP + c*WP + j  (output col = 2*j + pw)
    conv = jnp.dot(lhs, m_ref[...],
                   preferred_element_type=jnp.float32, precision=PREC)    # (32, 512)
    conv = jnp.maximum(conv + bc_ref[...], 0.0)

    # MaxPool2d(2,2): parity-major packing makes both pooling steps elementwise maxes
    # of tile-aligned halves (sublane halves for rows, lane halves for cols).
    hm = jnp.maximum(conv[:B * HP, :], conv[B * HP:, :])                  # row pool -> (16, 512)
    pooled = jnp.maximum(hm[:, :CWP], hm[:, CWP:])                        # col pool -> (16, 256)
    # pooled[b*HP + i, c*WP + j] == maxpool output (b, c, i, j)

    # Linear(2048 -> 2) on the VPU: lane-dense per-class weight tiles that match the
    # pooled layout, elementwise multiply + lane reduction + per-batch sublane reduction.
    lane_sums = []
    for n in range(NUM_CLASSES):
        wn = wfc_ref[pl.ds(n * B * HP, B * HP), :]                        # (16, 256)
        lane_sums.append(jnp.sum(pooled * wn, axis=1, keepdims=True))     # (16, 1)
    pc = jnp.concatenate(lane_sums, axis=1)                               # (16, NUM_CLASSES)
    rows = [jnp.sum(pc[b * HP:(b + 1) * HP, :], axis=0, keepdims=True)    # (1, NUM_CLASSES)
            for b in range(B)]
    o_ref[...] = jnp.concatenate(rows, axis=0) + bfc_ref[...]             # (B, NUM_CLASSES)


def _fused_call(x, m, bc, wfc, bfc):
    # No grid (single step): all operands are full-array VMEM blocks, no pipeline
    # scaffolding.  Total VMEM footprint is ~140 KB — fits every generation easily.
    return pl.pallas_call(
        fused_cnn_kernel,
        out_shape=jax.ShapeDtypeStruct((B, NUM_CLASSES), jnp.float32),
        scratch_shapes=[pltpu.VMEM((B * HPAD, W), jnp.float32)],
    )(x, m, bc, wfc, bfc)


# --------------------- one-time parameter repacking (host) ----------------- #
def prepare_params(w_conv, b_conv, w_fc, b_fc):
    """One-time repacking of PyTorch-layout params into kernel layouts (init only)."""
    wc = np.asarray(w_conv, dtype=np.float32)                    # (COUT, 1, 3, 3)

    # Merged banded conv matrix (width zero-padding folded into the band):
    #   m[kh*W + w_in, pw*CWP + c*WP + j] = wc[c, 0, kh, w_in - w_out + 1],  w_out = 2*j + pw
    m = np.zeros((KROWS, 2 * CWP), np.float32)
    for kh in range(KH):
        for c in range(COUT):
            for w_out in range(W):
                pw, j = w_out % 2, w_out // 2
                col = pw * CWP + c * WP + j
                for kw in range(KW):
                    w_in = w_out + kw - 1
                    if 0 <= w_in < W:
                        m[kh * W + w_in, col] = wc[c, 0, kh, kw]

    bias_row = np.tile(np.repeat(np.asarray(b_conv, np.float32), WP), 2)[None, :]  # (1, 512)

    # FC weight: class-major, lane-dense tiles matching the pooled layout
    # (row = n*B*HP + b*HP + i, col = c*WP + j; weight is batch-independent, so tiled over b).
    wfc = np.asarray(w_fc, np.float32).reshape(NUM_CLASSES, COUT, HP, WP)
    wfc = wfc.transpose(0, 2, 1, 3).reshape(NUM_CLASSES, HP, CWP)                   # [n, i, c*WP+j]
    wfc = np.tile(wfc[:, None, :, :], (1, B, 1, 1)).reshape(NUM_CLASSES * B * HP, CWP)
    bfc = np.asarray(b_fc, np.float32).reshape(1, NUM_CLASSES)

    return (jnp.asarray(m), jnp.asarray(bias_row),
            jnp.asarray(np.ascontiguousarray(wfc)), jnp.asarray(bfc))


# ------------------------------- forward pass ------------------------------ #
def medical_cnn_forward(x, packed):
    m, bc, wfc, bfc = packed
    # No host-side glue: the raw (B, 1, H, W) image goes straight into the kernel.
    return _fused_call(x, m, bc, wfc, bfc)


# --------------------------- pure-JAX reference ---------------------------- #
def reference_forward(x, w_conv, b_conv, w_fc, b_fc):
    conv = lax.conv_general_dilated(
        x, w_conv, window_strides=(1, 1), padding="SAME",
        dimension_numbers=("NCHW", "OIHW", "NCHW"), precision=PREC)
    conv = conv + b_conv[None, :, None, None]
    r = jnp.maximum(conv, 0.0)
    p = lax.reduce_window(r, -jnp.inf, lax.max,
                          window_dimensions=(1, 1, 2, 2),
                          window_strides=(1, 1, 2, 2), padding="VALID")
    feats = p.reshape(x.shape[0], -1)
    return jnp.dot(feats, w_fc.T, precision=PREC) + b_fc


if __name__ == "__main__":
    key = jax.random.PRNGKey(0)
    kx, kw1, kb1, kw2, kb2 = jax.random.split(key, 5)
    x = jax.random.normal(kx, (B, CIN, H, W), jnp.float32)
    w_conv = 0.1 * jax.random.normal(kw1, (COUT, CIN, KH, KW), jnp.float32)
    b_conv = 0.01 * jax.random.normal(kb1, (COUT,), jnp.float32)
    w_fc = 0.02 * jax.random.normal(kw2, (NUM_CLASSES, FEAT), jnp.float32)
    b_fc = 0.01 * jax.random.normal(kb2, (NUM_CLASSES,), jnp.float32)

    packed = prepare_params(w_conv, b_conv, w_fc, b_fc)   # one-time init (hoisted)
    fwd = jax.jit(medical_cnn_forward)

    out = jax.block_until_ready(fwd(x, packed))

    ref = reference_forward(x, w_conv, b_conv, w_fc, b_fc)
    if not bool(jnp.allclose(out, ref, atol=1e-3, rtol=1e-3)):
        raise AssertionError(f"mismatch:\npallas={out}\nref={ref}")
    print("KERNEL_OK")
</pallas_src>

<mosaic_0001>
module attributes {stable_mosaic.version = 11 : i64} {
  func.func @fused_cnn_kernel(%arg0: memref<2x1x16x16xf32, #tpu.memory_space<vmem>>, %arg1: memref<48x512xf32, #tpu.memory_space<vmem>>, %arg2: memref<1x512xf32, #tpu.memory_space<vmem>>, %arg3: memref<32x256xf32, #tpu.memory_space<vmem>>, %arg4: memref<1x2xf32, #tpu.memory_space<vmem>>, %arg5: memref<2x2xf32, #tpu.memory_space<vmem>>, %arg6: memref<36x16xf32, #tpu.memory_space<vmem>>) attributes {dimension_semantics = [], scalar_prefetch = 0 : i64, scratch_operands = 1 : i64, tpu.core_type = #tpu.core_type<tc>} {
    %cst = arith.constant 0.000000e+00 : f32
    %0 = vector.broadcast %cst : f32 to vector<36x16xf32>
    %c0 = arith.constant 0 : index
    %c0_0 = arith.constant 0 : index
    %1 = vector.load %arg6[%c0, %c0_0] : memref<36x16xf32, #tpu.memory_space<vmem>>, vector<36x16xf32>
    tpu.vector_store %arg6[%c0, %c0_0], %0 {strides = array<i32>} : memref<36x16xf32, #tpu.memory_space<vmem>>, vector<36x16xf32>,
    %c0_1 = arith.constant 0 : index
    %c0_2 = arith.constant 0 : index
    %c0_3 = arith.constant 0 : index
    %c0_4 = arith.constant 0 : index
    %2 = vector.load %arg0[%c0_1, %c0_2, %c0_3, %c0_4] : memref<2x1x16x16xf32, #tpu.memory_space<vmem>>, vector<1x1x16x16xf32>
    %3 = vector.shape_cast %2 : vector<1x1x16x16xf32> to vector<16x16xf32>
    %c1 = arith.constant 1 : index
    %c0_5 = arith.constant 0 : index
    %4 = vector.load %arg6[%c1, %c0_5] : memref<36x16xf32, #tpu.memory_space<vmem>>, vector<16x16xf32>
    tpu.vector_store %arg6[%c1, %c0_5], %3 {strides = array<i32>} : memref<36x16xf32, #tpu.memory_space<vmem>>, vector<16x16xf32>,
    %c1_6 = arith.constant 1 : index
    %c0_7 = arith.constant 0 : index
    %c0_8 = arith.constant 0 : index
    %c0_9 = arith.constant 0 : index
    %5 = vector.load %arg0[%c1_6, %c0_7, %c0_8, %c0_9] : memref<2x1x16x16xf32, #tpu.memory_space<vmem>>, vector<1x1x16x16xf32>
    %6 = vector.shape_cast %5 : vector<1x1x16x16xf32> to vector<16x16xf32>
    %c19 = arith.constant 19 : index
    %c0_10 = arith.constant 0 : index
    %7 = vector.load %arg6[%c19, %c0_10] : memref<36x16xf32, #tpu.memory_space<vmem>>, vector<16x16xf32>
    tpu.vector_store %arg6[%c19, %c0_10], %6 {strides = array<i32>} : memref<36x16xf32, #tpu.memory_space<vmem>>, vector<16x16xf32>,
    %c0_11 = arith.constant 0 : index
    %c0_12 = arith.constant 0 : index
    %8 = tpu.strided_load %arg6[%c0_11, %c0_12] {strides = array<i32: 2, 1>} : memref<36x16xf32, #tpu.memory_space<vmem>>, vector<8x16xf32>
    %c1_13 = arith.constant 1 : index
    %c0_14 = arith.constant 0 : index
    %9 = tpu.strided_load %arg6[%c1_13, %c0_14] {strides = array<i32: 2, 1>} : memref<36x16xf32, #tpu.memory_space<vmem>>, vector<8x16xf32>
    %c2 = arith.constant 2 : index
    %c0_15 = arith.constant 0 : index
    %10 = tpu.strided_load %arg6[%c2, %c0_15] {strides = array<i32: 2, 1>} : memref<36x16xf32, #tpu.memory_space<vmem>>, vector<8x16xf32>
    %11 = tpu.concatenate %8, %9, %10 in 1 : vector<8x16xf32>, vector<8x16xf32>, vector<8x16xf32> -> vector<8x48xf32>
    %c18 = arith.constant 18 : index
    %c0_16 = arith.constant 0 : index
    %12 = tpu.strided_load %arg6[%c18, %c0_16] {strides = array<i32: 2, 1>} : memref<36x16xf32, #tpu.memory_space<vmem>>, vector<8x16xf32>
    %c19_17 = arith.constant 19 : index
    %c0_18 = arith.constant 0 : index
    %13 = tpu.strided_load %arg6[%c19_17, %c0_18] {strides = array<i32: 2, 1>} : memref<36x16xf32, #tpu.memory_space<vmem>>, vector<8x16xf32>
    %c20 = arith.constant 20 : index
    %c0_19 = arith.constant 0 : index
    %14 = tpu.strided_load %arg6[%c20, %c0_19] {strides = array<i32: 2, 1>} : memref<36x16xf32, #tpu.memory_space<vmem>>, vector<8x16xf32>
    %15 = tpu.concatenate %12, %13, %14 in 1 : vector<8x16xf32>, vector<8x16xf32>, vector<8x16xf32> -> vector<8x48xf32>
    %16 = tpu.concatenate %11, %15 in 0 : vector<8x48xf32>, vector<8x48xf32> -> vector<16x48xf32>
    %c1_20 = arith.constant 1 : index
    %c0_21 = arith.constant 0 : index
    %17 = tpu.strided_load %arg6[%c1_20, %c0_21] {strides = array<i32: 2, 1>} : memref<36x16xf32, #tpu.memory_space<vmem>>, vector<8x16xf32>
    %c2_22 = arith.constant 2 : index
    %c0_23 = arith.constant 0 : index
    %18 = tpu.strided_load %arg6[%c2_22, %c0_23] {strides = array<i32: 2, 1>} : memref<36x16xf32, #tpu.memory_space<vmem>>, vector<8x16xf32>
    %c3 = arith.constant 3 : index
    %c0_24 = arith.constant 0 : index
    %19 = tpu.strided_load %arg6[%c3, %c0_24] {strides = array<i32: 2, 1>} : memref<36x16xf32, #tpu.memory_space<vmem>>, vector<8x16xf32>
    %20 = tpu.concatenate %17, %18, %19 in 1 : vector<8x16xf32>, vector<8x16xf32>, vector<8x16xf32> -> vector<8x48xf32>
    %c19_25 = arith.constant 19 : index
    %c0_26 = arith.constant 0 : index
    %21 = tpu.strided_load %arg6[%c19_25, %c0_26] {strides = array<i32: 2, 1>} : memref<36x16xf32, #tpu.memory_space<vmem>>, vector<8x16xf32>
    %c20_27 = arith.constant 20 : index
    %c0_28 = arith.constant 0 : index
    %22 = tpu.strided_load %arg6[%c20_27, %c0_28] {strides = array<i32: 2, 1>} : memref<36x16xf32, #tpu.memory_space<vmem>>, vector<8x16xf32>
    %c21 = arith.constant 21 : index
    %c0_29 = arith.constant 0 : index
    %23 = tpu.strided_load %arg6[%c21, %c0_29] {strides = array<i32: 2, 1>} : memref<36x16xf32, #tpu.memory_space<vmem>>, vector<8x16xf32>
    %24 = tpu.concatenate %21, %22, %23 in 1 : vector<8x16xf32>, vector<8x16xf32>, vector<8x16xf32> -> vector<8x48xf32>
    %25 = tpu.concatenate %20, %24 in 0 : vector<8x48xf32>, vector<8x48xf32> -> vector<16x48xf32>
    %26 = tpu.concatenate %16, %25 in 0 : vector<16x48xf32>, vector<16x48xf32> -> vector<32x48xf32>
    %c0_30 = arith.constant 0 : index
    %c0_31 = arith.constant 0 : index
    %27 = vector.load %arg1[%c0_30, %c0_31] : memref<48x512xf32, #tpu.memory_space<vmem>>, vector<48x512xf32>
    %cst_32 = arith.constant dense<0.000000e+00> : vector<32x512xf32>
    %28 = tpu.matmul %26, %27, %cst_32 {dimension_numbers = #tpu.dot_dimension_numbers<[1], [0], [0], [1], [0, 0, 1, 1], [], []>, precision = #tpu.contract_precision<fp32>} : vector<32x48xf32>, vector<48x512xf32>, vector<32x512xf32> -> vector<32x512xf32>
    %c0_33 = arith.constant 0 : index
    %c0_34 = arith.constant 0 : index
    %29 = vector.load %arg2[%c0_33, %c0_34] : memref<1x512xf32, #tpu.memory_space<vmem>>, vector<1x512xf32>
    %30 = vector.broadcast %29 : vector<1x512xf32> to vector<32x512xf32>
    %31 = arith.addf %28, %30 : vector<32x512xf32>
    %cst_35 = arith.constant 0.000000e+00 : f32
    %32 = vector.broadcast %cst_35 : f32 to vector<32x512xf32>
    %33 = arith.maximumf %31, %32 : vector<32x512xf32>
    %34 = vector.extract_strided_slice %33 {offsets = [0, 0], sizes = [16, 512], strides = [1, 1]} : vector<32x512xf32> to vector<16x512xf32>
    %35 = vector.extract_strided_slice %33 {offsets = [16, 0], sizes = [16, 512], strides = [1, 1]} : vector<32x512xf32> to vector<16x512xf32>
    %36 = arith.maximumf %34, %35 : vector<16x512xf32>
    %37 = vector.extract_strided_slice %36 {offsets = [0, 0], sizes = [16, 256], strides = [1, 1]} : vector<16x512xf32> to vector<16x256xf32>
    %38 = vector.extract_strided_slice %36 {offsets = [0, 256], sizes = [16, 256], strides = [1, 1]} : vector<16x512xf32> to vector<16x256xf32>
    %39 = arith.maximumf %37, %38 : vector<16x256xf32>
    %c0_36 = arith.constant 0 : index
    %c0_37 = arith.constant 0 : index
    %40 = vector.load %arg3[%c0_36, %c0_37] : memref<32x256xf32, #tpu.memory_space<vmem>>, vector<16x256xf32>
    %41 = arith.mulf %39, %40 : vector<16x256xf32>
    %cst_38 = arith.constant dense<0.000000e+00> : vector<16xf32>
    %42 = vector.multi_reduction <add>, %41, %cst_38 [1] : vector<16x256xf32> to vector<16xf32>
    %43 = vector.shape_cast %42 : vector<16xf32> to vector<16x1xf32>
    %c16 = arith.constant 16 : index
    %c0_39 = arith.constant 0 : index
    %44 = vector.load %arg3[%c16, %c0_39] : memref<32x256xf32, #tpu.memory_space<vmem>>, vector<16x256xf32>
    %45 = arith.mulf %39, %44 : vector<16x256xf32>
    %cst_40 = arith.constant dense<0.000000e+00> : vector<16xf32>
    %46 = vector.multi_reduction <add>, %45, %cst_40 [1] : vector<16x256xf32> to vector<16xf32>
    %47 = vector.shape_cast %46 : vector<16xf32> to vector<16x1xf32>
    %48 = tpu.concatenate %43, %47 in 1 : vector<16x1xf32>, vector<16x1xf32> -> vector<16x2xf32>
    %49 = vector.extract_strided_slice %48 {offsets = [0, 0], sizes = [8, 2], strides = [1, 1]} : vector<16x2xf32> to vector<8x2xf32>
    %cst_41 = arith.constant dense<0.000000e+00> : vector<2xf32>
    %50 = vector.multi_reduction <add>, %49, %cst_41 [0] : vector<8x2xf32> to vector<2xf32>
    %51 = vector.shape_cast %50 : vector<2xf32> to vector<1x2xf32>
    %52 = vector.extract_strided_slice %48 {offsets = [8, 0], sizes = [8, 2], strides = [1, 1]} : vector<16x2xf32> to vector<8x2xf32>
    %cst_42 = arith.constant dense<0.000000e+00> : vector<2xf32>
    %53 = vector.multi_reduction <add>, %52, %cst_42 [0] : vector<8x2xf32> to vector<2xf32>
    %54 = vector.shape_cast %53 : vector<2xf32> to vector<1x2xf32>
    %55 = tpu.concatenate %51, %54 in 0 : vector<1x2xf32>, vector<1x2xf32> -> vector<2x2xf32>
    %c0_43 = arith.constant 0 : index
    %c0_44 = arith.constant 0 : index
    %56 = vector.load %arg4[%c0_43, %c0_44] : memref<1x2xf32, #tpu.memory_space<vmem>>, vector<1x2xf32>
    %57 = vector.broadcast %56 : vector<1x2xf32> to vector<2x2xf32>
    %58 = arith.addf %55, %57 : vector<2x2xf32>
    %c0_45 = arith.constant 0 : index
    %c0_46 = arith.constant 0 : index
    %59 = vector.load %arg5[%c0_45, %c0_46] : memref<2x2xf32, #tpu.memory_space<vmem>>, vector<2x2xf32>
    tpu.vector_store %arg5[%c0_45, %c0_46], %58 {strides = array<i32>} : memref<2x2xf32, #tpu.memory_space<vmem>>, vector<2x2xf32>,
    return
  }
}

</mosaic_0001>

<llo_original>
// kernel: medical_cnn_forward.1
$region0: #{medical_cnn_forward.1}
  #allocation0 [shape = 'u32[]', space=smem, size = 0x4, offset = 0x4, fixed_abs, tag = 'smem constant byte address 0x4 - core index']
  #allocation1 [shape = 'u32[144,128]{1,0:T(1,128)}', space=vmem, size = 0x12000, scoped, tag = 'internal scratch']
  #allocation2 [shape = 'f32[36,16]{1,0:T(8,128)}', space=vmem, size = 0x5000, scoped, tag = 'scratch operand']
  %s0 = inlined_call_operand.hbm [shape: f32[2,1,16,16], index: 0, kind: input, shape index: {}]
  %s1 = inlined_call_operand.hbm [shape: f32[48,512], index: 1, kind: input, shape index: {}]
  %s2 = inlined_call_operand.hbm [shape: f32[1,512], index: 2, kind: input, shape index: {}]
  %s3 = inlined_call_operand.hbm [shape: f32[32,256], index: 3, kind: input, shape index: {}]
  %s4 = inlined_call_operand.vmem [shape: f32[1,2], index: 4, kind: input, shape index: {}]
  %s5 = inlined_call_operand.hbm [shape: f32[2,2], index: 5, kind: output, shape index: {}]
  %s6 = sld [smem:[#allocation0]]
  $region46: #{medical_cnn_forward.1} parent=0
    _
  %s8 = ssub.s32 1, %s6
  %s9 = scalar_select 0, %s8, %s6
  $region1: #{medical_cnn_forward.1} parent=0
    #allocation3 [shape = 'u8[16384]{0}', space=vmem, size = 0x4000, scoped, tag = 'input window, operand 0, single buffered']
    #allocation4 [shape = 's32[1]{0}', space=sflag, size = 0x4, scoped, tag = 'scoped memory for medical_cnn_forward.1']
    #allocation5 [shape = 's32[1]{0}', space=sflag, size = 0x4, scoped, tag = 'scoped memory for medical_cnn_forward.1']
    #allocation6 [shape = 'u8[98304]{0}', space=vmem, size = 0x18000, scoped, tag = 'input window, operand 1, single buffered']
    #allocation7 [shape = 's32[1]{0}', space=sflag, size = 0x4, scoped, tag = 'scoped memory for medical_cnn_forward.1']
    #allocation8 [shape = 'u8[2048]{0}', space=vmem, size = 0x800, scoped, tag = 'input window, operand 2, single buffered']
    #allocation9 [shape = 'u8[32768]{0}', space=vmem, size = 0x8000, scoped, tag = 'input window, operand 3, single buffered']
    #allocation10 [shape = 's32[1]{0}', space=sflag, size = 0x4, scoped, tag = 'scoped memory for medical_cnn_forward.1']
    #allocation11 [shape = 'u8[1024]{0}', space=vmem, size = 0x400, scoped, tag = 'output window, operand 0, single buffered']
    %10 = vsyncpa [#allocation4], 0
    %11 = vsyncpa [#allocation7], 0
    %12 = vsyncpa [#allocation10], 0
    %13 = vsyncpa [#allocation5], 0
    // Predicated region
    $region2: #{medical_cnn_forward.1} parent=1 // pred_check
      _
    $region3: #{medical_cnn_forward.1} parent=1 // pred_check_branch
      %15 = sbr.rel (0) target = $region5
    $region4: #{medical_cnn_forward.1} parent=1 // pred_region
      %s17 = ssub.s32 512, 512
      %18 = vsyncadd [#allocation4], %s17
      %s19 = sshll.u32 [#allocation3], 4
      %s20 = int_to_ptr.vmem [resolvable:$true] %s19
      %25 = dma.hbm_to_vmem [thread:$0]  %s0, 512, %s20, [#allocation4], 128, 128, 8
    $region5: #{medical_cnn_forward.1} parent=1 // pred_fallthru
      _
    // Predicated region
    $region6: #{medical_cnn_forward.1} parent=1 // pred_check
      _
    $region7: #{medical_cnn_forward.1} parent=1 // pred_check_branch
      %27 = sbr.rel (0) target = $region9
    $region8: #{medical_cnn_forward.1} parent=1 // pred_region
      %s29 = ssub.s32 3072, 3072
      %30 = vsyncadd [#allocation7], %s29
      %s31 = sshll.u32 [#allocation6], 4
      %s32 = int_to_ptr.vmem [resolvable:$true] %s31
      %37 = dma.hbm_to_vmem [thread:$0]  %s1, 3072, %s32, [#allocation7], 512, 512, 32
    $region9: #{medical_cnn_forward.1} parent=1 // pred_fallthru
      _
    // Predicated region
    $region10: #{medical_cnn_forward.1} parent=1 // pred_check
      _
    $region11: #{medical_cnn_forward.1} parent=1 // pred_check_branch
      %39 = sbr.rel (0) target = $region13
    $region12: #{medical_cnn_forward.1} parent=1 // pred_region
      %s41 = ssub.s32 64, 64
      %42 = vsyncadd [#allocation7], %s41
      %s44 = sshll.u32 [#allocation8], 4
      %s45 = int_to_ptr.vmem [resolvable:$true] %s44
      %47 = dma.hbm_to_vmem [thread:$0]  %s2, 64, %s45, [#allocation7]
    $region13: #{medical_cnn_forward.1} parent=1 // pred_fallthru
      _
    // Predicated region
    $region14: #{medical_cnn_forward.1} parent=1 // pred_check
      _
    $region15: #{medical_cnn_forward.1} parent=1 // pred_check_branch
      %49 = sbr.rel (0) target = $region17
    $region16: #{medical_cnn_forward.1} parent=1 // pred_region
      %s51 = ssub.s32 1024, 1024
      %52 = vsyncadd [#allocation10], %s51
      %s53 = sshll.u32 [#allocation9], 4
      %s54 = int_to_ptr.vmem [resolvable:$true] %s53
      %59 = dma.hbm_to_vmem [thread:$0]  %s3, 1024, %s54, [#allocation10], 256, 256, 16
    $region17: #{medical_cnn_forward.1} parent=1 // pred_fallthru
      _
    // Predicated region
    $region18: #{medical_cnn_forward.1} parent=1 // pred_check
      _
    $region19: #{medical_cnn_forward.1} parent=1 // pred_check_branch
      %61 = sbr.rel (0) target = $region21
    $region20: #{medical_cnn_forward.1} parent=1 // pred_region
      _
    $region21: #{medical_cnn_forward.1} parent=1 // pred_fallthru
      _
    // Predicated region
    $region22: #{medical_cnn_forward.1} parent=1 // pred_check
      _
    $region23: #{medical_cnn_forward.1} parent=1 // pred_check_branch
      %63 = sbr.rel (0) target = $region25
    $region24: #{medical_cnn_forward.1} parent=1 // pred_region
      %64 = dma.done [#allocation4], 512
    $region25: #{medical_cnn_forward.1} parent=1 // pred_fallthru
      _
    // Predicated region
    $region26: #{medical_cnn_forward.1} parent=1 // pred_check
      _
    $region27: #{medical_cnn_forward.1} parent=1 // pred_check_branch
      %66 = sbr.rel (0) target = $region29
    $region28: #{medical_cnn_forward.1} parent=1 // pred_region
      %67 = dma.done [#allocation7], 3072
    $region29: #{medical_cnn_forward.1} parent=1 // pred_fallthru
      _
    // Predicated region
    $region30: #{medical_cnn_forward.1} parent=1 // pred_check
      _
    $region31: #{medical_cnn_forward.1} parent=1 // pred_check_branch
      %69 = sbr.rel (0) target = $region33
    $region32: #{medical_cnn_forward.1} parent=1 // pred_region
      %70 = dma.done [#allocation7], 64
    $region33: #{medical_cnn_forward.1} parent=1 // pred_fallthru
      _
    // Predicated region
    $region34: #{medical_cnn_forward.1} parent=1 // pred_check
      _
    $region35: #{medical_cnn_forward.1} parent=1 // pred_check_branch
      %72 = sbr.rel (0) target = $region37
    $region36: #{medical_cnn_forward.1} parent=1 // pred_region
      %73 = dma.done [#allocation10], 1024
    $region37: #{medical_cnn_forward.1} parent=1 // pred_fallthru
      _
    %vm74 = vcmask 130048
    %75 = vst.msk [vmem:[#allocation2] sm:$0xff] %vm74, 0.0
    %76 = vst.msk [vmem:[#allocation2 + $0x8] sm:$0xff] %vm74, 0.0
    %77 = vst.msk [vmem:[#allocation2 + $0x10] sm:$0xff] %vm74, 0.0
    %78 = vst.msk [vmem:[#allocation2 + $0x18] sm:$0xff] %vm74, 0.0
    %vm79 = vcmask 125952
    %80 = vst.msk [vmem:[#allocation2 + $0x20] sm:$0xf] %vm79, 0.0
    %v81 = vld [vmem:[#allocation3] sm:$0xff]
    %v82 = vld [vmem:[#allocation3 + $0x8] sm:$0xff]
    %83 = vst.msk [vmem:[#allocation2 + $0x1] sm:$0xff] %vm74, %v81
    %84 = vst.msk [vmem:[#allocation2 + $0x9] sm:$0xff] %vm74, %v82
    %s85 = scalar_lea.vmem [#allocation3], 16
    %v86 = vld [vmem:[%s85] sm:$0xff]
    %v87 = vld [vmem:[%s85 + $0x8] sm:$0xff]
    %88 = vst.msk [vmem:[#allocation2 + $0x13] sm:$0xff] %vm74, %v86
    %89 = vst.msk [vmem:[#allocation2 + $0x1b] sm:$0xff] %vm74, %v87
    %v90 = vld [vmem:[#allocation2] ss:$2 sm:$0xff]
    %s91 = scalar_lea.vmem [#allocation2], 1
    %v92 = vld [vmem:[%s91] ss:$2 sm:$0xff]
    %s93 = scalar_lea.vmem [#allocation2], 2
    %v94 = vld [vmem:[%s93] ss:$2 sm:$0xff]
    %96 = vrot.lane.b32.xlu0 %v92, 16
    %v97 = vpop.permute.xlu0 %96
    %100 = vrot.lane.b32.xlu0 %v94, 32
    %v101 = vpop.permute.xlu0 %100
    %v103 = vsel %vm74, %v90, %v97
    %vm104 = vcmask 261120
    %v105 = vsel %vm104, %v103, %v101
    %s106 = scalar_lea.vmem [#allocation2], 18
    %v107 = vld [vmem:[%s106] ss:$2 sm:$0xff]
    %s108 = scalar_lea.vmem [#allocation2], 19
    %v109 = vld [vmem:[%s108] ss:$2 sm:$0xff]
    %s110 = scalar_lea.vmem [#allocation2], 20
    %v111 = vld [vmem:[%s110] ss:$2 sm:$0xff]
    %113 = vrot.lane.b32.xlu0 %v109, 16
    %v114 = vpop.permute.xlu0 %113
    %117 = vrot.lane.b32.xlu0 %v111, 32
    %v118 = vpop.permute.xlu0 %117
    %v120 = vsel %vm74, %v107, %v114
    %v121 = vsel %vm104, %v120, %v118
    %s122 = scalar_lea.vmem [#allocation2], 3
    %v123 = vld [vmem:[%s122] ss:$2 sm:$0xff]
    %124 = vrot.lane.b32.xlu0 %v94, 16
    %v125 = vpop.permute.xlu0 %124
    %128 = vrot.lane.b32.xlu0 %v123, 32
    %v129 = vpop.permute.xlu0 %128
    %v131 = vsel %vm74, %v92, %v125
    %v132 = vsel %vm104, %v131, %v129
    %s133 = scalar_lea.vmem [#allocation2], 21
    %v134 = vld [vmem:[%s133] ss:$2 sm:$0xff]
    %135 = vrot.lane.b32.xlu0 %v111, 16
    %v136 = vpop.permute.xlu0 %135
    %139 = vrot.lane.b32.xlu0 %v134, 32
    %v140 = vpop.permute.xlu0 %139
    %v142 = vsel %vm74, %v109, %v136
    %v143 = vsel %vm104, %v142, %v140
    %v144 = vld [vmem:[#allocation6] sm:$0xff]
    %v145 = vld [vmem:[#allocation6 + $0x8] sm:$0xff]
    %v146 = vld [vmem:[#allocation6 + $0x10] sm:$0xff]
    %v147 = vld [vmem:[#allocation6 + $0x18] sm:$0xff]
    %v148 = vld [vmem:[#allocation6 + $0x20] sm:$0xff]
    %v149 = vld [vmem:[#allocation6 + $0x28] sm:$0xff]
    %v150 = vld [vmem:[#allocation6 + $0x30] sm:$0xff]
    %v151 = vld [vmem:[#allocation6 + $0x38] sm:$0xff]
    %v152 = vld [vmem:[#allocation6 + $0x40] sm:$0xff]
    %v153 = vld [vmem:[#allocation6 + $0x48] sm:$0xff]
    %v154 = vld [vmem:[#allocation6 + $0x50] sm:$0xff]
    %v155 = vld [vmem:[#allocation6 + $0x58] sm:$0xff]
    %v156 = vld [vmem:[#allocation6 + $0x60] sm:$0xff]
    %v157 = vld [vmem:[#allocation6 + $0x68] sm:$0xff]
    %v158 = vld [vmem:[#allocation6 + $0x70] sm:$0xff]
    %v159 = vld [vmem:[#allocation6 + $0x78] sm:$0xff]
    %v160 = vld [vmem:[#allocation6 + $0x80] sm:$0xff]
    %v161 = vld [vmem:[#allocation6 + $0x88] sm:$0xff]
    %v162 = vld [vmem:[#allocation6 + $0x90] sm:$0xff]
    %v163 = vld [vmem:[#allocation6 + $0x98] sm:$0xff]
    %v164 = vld [vmem:[#allocation6 + $0xa0] sm:$0xff]
    %v165 = vld [vmem:[#allocation6 + $0xa8] sm:$0xff]
    %v166 = vld [vmem:[#allocation6 + $0xb0] sm:$0xff]
    %v167 = vld [vmem:[#allocation6 + $0xb8] sm:$0xff]
    %v168 = vld [vmem:[#allocation8] sm:$0xf]
    %v170 = vlaneseq
    %v171 = vshrl.u32 %v170, 7
    %v172 = vsub.s32 0, %v171
    %v173 = vrot.slane %v168, %v172
    %v174 = vlaneseq
    %v175 = vshrl.u32 %v174, 7
    %v176 = vsub.s32 1, %v175
    %v177 = vrot.slane %v168, %v176
    %v178 = vlaneseq
    %v179 = vshrl.u32 %v178, 7
    %v180 = vsub.s32 2, %v179
    %v181 = vrot.slane %v168, %v180
    %v182 = vlaneseq
    %v183 = vshrl.u32 %v182, 7
    %v184 = vsub.s32 3, %v183
    %v185 = vrot.slane %v168, %v184
    %vm190 = vcmask 392192
    %v192 = vsel %vm190, %v105, 0
    %v195 = vsel %vm190, %v121, 0
    %v198 = vsel %vm190, %v132, 0
    %v201 = vsel %vm190, %v143, 0
    %203 = vmatprep.subr.mxu0 0.0
    %204 = vmatpush1.msra.mxu0 0.0
    %205 = vmatprep.subr.mxu0 0.0
    %206 = vmatpush1.msra.mxu0 0.0
    %207 = vmatprep.subr.mxu0 0.0
    %208 = vmatpush1.msra.mxu0 0.0
    %209 = vmatprep.subr.mxu0 0.0
    %210 = vmatpush1.msra.mxu0 0.0
    %211 = vmatprep.subr.mxu0 0.0
    %212 = vmatpush1.msra.mxu0 0.0
    %213 = vmatprep.subr.mxu0 0.0
    %214 = vmatpush1.msra.mxu0 0.0
    %215 = vmatprep.subr.mxu0 0.0
    %216 = vmatpush1.msra.mxu0 0.0
    %217 = vmatprep.subr.mxu0 0.0
    %218 = vmatpush1.msra.mxu0 0.0
    %219 = vmatprep.subr.mxu0 0.0
    %220 = vmatpush1.msra.mxu0 0.0
    %221 = vmatprep.subr.mxu0 0.0
    %222 = vmatpush1.msra.mxu0 0.0
    %v223 = vand.u32 %v165, 4294901760
    %224 = vmatprep.subr.mxu0 %v223
    %v225 = vand.u32 %v164, 4294901760
    %226 = vmatpush1.msra.mxu0 %v225
    %v227 = vand.u32 %v161, 4294901760
    %228 = vmatprep.subr.mxu0 %v227
    %v229 = vand.u32 %v160, 4294901760
    %230 = vmatpush1.msra.mxu0 %v229
    %v231 = vand.u32 %v157, 4294901760
    %232 = vmatprep.subr.mxu0 %v231
    %v233 = vand.u32 %v156, 4294901760
    %234 = vmatpush1.msra.mxu0 %v233
    %v235 = vand.u32 %v153, 4294901760
    %236 = vmatprep.subr.mxu0 %v235
    %v237 = vand.u32 %v152, 4294901760
    %238 = vmatpush1.msra.mxu0 %v237
    %v239 = vand.u32 %v149, 4294901760
    %240 = vmatprep.subr.mxu0 %v239
    %v241 = vand.u32 %v148, 4294901760
    %242 = vmatpush1.msra.mxu0 %v241
    %v243 = vand.u32 %v145, 4294901760
    %244 = vmatprep.subr.mxu0 %v243
    %v245 = vand.u32 %v144, 4294901760
    %246 = vmatpush1.msra.mxu0 %v245
    %247 = vmatprep.subr.mxu0 0.0
    %248 = vmatpush2.msra.mxu0 0.0
    %249 = vmatprep.subr.mxu0 0.0
    %250 = vmatpush2.msra.mxu0 0.0
    %251 = vmatprep.subr.mxu0 0.0
    %252 = vmatpush2.msra.mxu0 0.0
    %253 = vmatprep.subr.mxu0 0.0
    %254 = vmatpush2.msra.mxu0 0.0
    %255 = vmatprep.subr.mxu0 0.0
    %256 = vmatpush2.msra.mxu0 0.0
    %257 = vmatprep.subr.mxu0 0.0
    %258 = vmatpush2.msra.mxu0 0.0
    %259 = vmatprep.subr.mxu0 0.0
    %260 = vmatpush2.msra.mxu0 0.0
    %261 = vmatprep.subr.mxu0 0.0
    %262 = vmatpush2.msra.mxu0 0.0
    %263 = vmatprep.subr.mxu0 0.0
    %264 = vmatpush2.msra.mxu0 0.0
    %265 = vmatprep.subr.mxu0 0.0
    %266 = vmatpush2.msra.mxu0 0.0
    %267 = vmatprep.subr.mxu0 0.0
    %268 = vmatpush2.msra.mxu0 0.0
    %269 = vmatprep.subr.mxu0 0.0
    %270 = vmatpush2.msra.mxu0 0.0
    %271 = vmatprep.subr.mxu0 0.0
    %272 = vmatpush2.msra.mxu0 0.0
    %273 = vmatprep.subr.mxu0 0.0
    %274 = vmatpush2.msra.mxu0 0.0
    %275 = vmatprep.subr.mxu0 0.0
    %276 = vmatpush2.msra.mxu0 0.0
    %277 = vmatprep.subr.mxu0 0.0
    %278 = vmatpush2.msra.mxu0 0.0
    %279 = vmatprep.mubr.f32.mxu0 0.0
    %v280 = vand.u32 %v192, 4294901760
    %v281 = vsub.f32 %v192, %v280
    %v282 = vand.u32 %v281, 4294901760
    %v283 = vsub.f32 %v281, %v282
    %v284 = vand.u32 %v283, 4294901760
    %285 = vmatmul.mubr.f32.gmra.mxu0 %v284
    %v286 = vpop.f32.mrf.mxu0
    %v287 = vadd.f32 %v173, %v286
    %v288 = vpop.f32.mrf.mxu0
    %v289 = vadd.f32 %v177, %v288
    %290 = vmatprep.mubr.f32.mxu0 0.0
    %v291 = vand.u32 %v195, 4294901760
    %v292 = vsub.f32 %v195, %v291
    %v293 = vand.u32 %v292, 4294901760
    %v294 = vsub.f32 %v292, %v293
    %v295 = vand.u32 %v294, 4294901760
    %296 = vmatmul.mubr.f32.gmra.mxu0 %v295
    %v297 = vpop.f32.mrf.mxu0
    %v298 = vadd.f32 %v173, %v297
    %v299 = vpop.f32.mrf.mxu0
    %v300 = vadd.f32 %v177, %v299
    %301 = vmatprep.mubr.f32.mxu0 0.0
    %v302 = vand.u32 %v198, 4294901760
    %v303 = vsub.f32 %v198, %v302
    %v304 = vand.u32 %v303, 4294901760
    %v305 = vsub.f32 %v303, %v304
    %v306 = vand.u32 %v305, 4294901760
    %307 = vmatmul.mubr.f32.gmra.mxu0 %v306
    %v308 = vpop.f32.mrf.mxu0
    %v309 = vadd.f32 %v173, %v308
    %v310 = vpop.f32.mrf.mxu0
    %v311 = vadd.f32 %v177, %v310
    %312 = vmatprep.mubr.f32.mxu0 0.0
    %v313 = vand.u32 %v201, 4294901760
    %v314 = vsub.f32 %v201, %v313
    %v315 = vand.u32 %v314, 4294901760
    %v316 = vsub.f32 %v314, %v315
    %v317 = vand.u32 %v316, 4294901760
    %318 = vmatmul.mubr.f32.gmra.mxu0 %v317
    %v319 = vpop.f32.mrf.mxu0
    %v320 = vadd.f32 %v173, %v319
    %v321 = vpop.f32.mrf.mxu0
    %v322 = vadd.f32 %v177, %v321
    %323 = vdwg.mxu0
    %324 = vmatprep.subr.mxu0 0.0
    %325 = vmatpush1.msra.mxu0 0.0
    %326 = vmatprep.subr.mxu0 0.0
    %327 = vmatpush1.msra.mxu0 0.0
    %328 = vmatprep.subr.mxu0 0.0
    %329 = vmatpush1.msra.mxu0 0.0
    %330 = vmatprep.subr.mxu0 0.0
    %331 = vmatpush1.msra.mxu0 0.0
    %332 = vmatprep.subr.mxu0 0.0
    %333 = vmatpush1.msra.mxu0 0.0
    %334 = vmatprep.subr.mxu0 0.0
    %335 = vmatpush1.msra.mxu0 0.0
    %336 = vmatprep.subr.mxu0 0.0
    %337 = vmatpush1.msra.mxu0 0.0
    %338 = vmatprep.subr.mxu0 0.0
    %339 = vmatpush1.msra.mxu0 0.0
    %340 = vmatprep.subr.mxu0 0.0
    %341 = vmatpush1.msra.mxu0 0.0
    %342 = vmatprep.subr.mxu0 0.0
    %343 = vmatpush1.msra.mxu0 0.0
    %v344 = vand.u32 %v165, 4294901760
    %v345 = vsub.f32 %v165, %v344
    %v346 = vand.u32 %v345, 4294901760
    %v347 = vsub.f32 %v345, %v346
    %v348 = vand.u32 %v347, 4294901760
    %349 = vmatprep.subr.mxu0 %v348
    %v350 = vand.u32 %v164, 4294901760
    %v351 = vsub.f32 %v164, %v350
    %v352 = vand.u32 %v351, 4294901760
    %v353 = vsub.f32 %v351, %v352
    %v354 = vand.u32 %v353, 4294901760
    %355 = vmatpush1.msra.mxu0 %v354
    %v356 = vand.u32 %v161, 4294901760
    %v357 = vsub.f32 %v161, %v356
    %v358 = vand.u32 %v357, 4294901760
    %v359 = vsub.f32 %v357, %v358
    %v360 = vand.u32 %v359, 4294901760
    %361 = vmatprep.subr.mxu0 %v360
    %v362 = vand.u32 %v160, 4294901760
    %v363 = vsub.f32 %v160, %v362
    %v364 = vand.u32 %v363, 4294901760
    %v365 = vsub.f32 %v363, %v364
    %v366 = vand.u32 %v365, 4294901760
    %367 = vmatpush1.msra.mxu0 %v366
    %v368 = vand.u32 %v157, 4294901760
    %v369 = vsub.f32 %v157, %v368
    %v370 = vand.u32 %v369, 4294901760
    %v371 = vsub.f32 %v369, %v370
    %v372 = vand.u32 %v371, 4294901760
    %373 = vmatprep.subr.mxu0 %v372
    %v374 = vand.u32 %v156, 4294901760
    %v375 = vsub.f32 %v156, %v374
    %v376 = vand.u32 %v375, 4294901760
    %v377 = vsub.f32 %v375, %v376
    %v378 = vand.u32 %v377, 4294901760
    %379 = vmatpush1.msra.mxu0 %v378
    %v380 = vand.u32 %v153, 4294901760
    %v381 = vsub.f32 %v153, %v380
    %v382 = vand.u32 %v381, 4294901760
    %v383 = vsub.f32 %v381, %v382
    %v384 = vand.u32 %v383, 4294901760
    %385 = vmatprep.subr.mxu0 %v384
    %v386 = vand.u32 %v152, 4294901760
    %v387 = vsub.f32 %v152, %v386
    %v388 = vand.u32 %v387, 4294901760
    %v389 = vsub.f32 %v387, %v388
    %v390 = vand.u32 %v389, 4294901760
    %391 = vmatpush1.msra.mxu0 %v390
    %v392 = vand.u32 %v149, 4294901760
    %v393 = vsub.f32 %v149, %v392
    %v394 = vand.u32 %v393, 4294901760
    %v395 = vsub.f32 %v393, %v394
    %v396 = vand.u32 %v395, 4294901760
    %397 = vmatprep.subr.mxu0 %v396
    %v398 = vand.u32 %v148, 4294901760
    %v399 = vsub.f32 %v148, %v398
    %v400 = vand.u32 %v399, 4294901760
    %v401 = vsub.f32 %v399, %v400
    %v402 = vand.u32 %v401, 4294901760
    %403 = vmatpush1.msra.mxu0 %v402
    %v404 = vand.u32 %v145, 4294901760
    %v405 = vsub.f32 %v145, %v404
    %v406 = vand.u32 %v405, 4294901760
    %v407 = vsub.f32 %v405, %v406
    %v408 = vand.u32 %v407, 4294901760
    %409 = vmatprep.subr.mxu0 %v408
    %v410 = vand.u32 %v144, 4294901760
    %v411 = vsub.f32 %v144, %v410
    %v412 = vand.u32 %v411, 4294901760
    %v413 = vsub.f32 %v411, %v412
    %v414 = vand.u32 %v413, 4294901760
    %415 = vmatpush1.msra.mxu0 %v414
    %416 = vmatprep.subr.mxu0 0.0
    %417 = vmatpush2.msra.mxu0 0.0
    %418 = vmatprep.subr.mxu0 0.0
    %419 = vmatpush2.msra.mxu0 0.0
    %420 = vmatprep.subr.mxu0 0.0
    %421 = vmatpush2.msra.mxu0 0.0
    %422 = vmatprep.subr.mxu0 0.0
    %423 = vmatpush2.msra.mxu0 0.0
    %424 = vmatprep.subr.mxu0 0.0
    %425 = vmatpush2.msra.mxu0 0.0
    %426 = vmatprep.subr.mxu0 0.0
    %427 = vmatpush2.msra.mxu0 0.0
    %428 = vmatprep.subr.mxu0 0.0
    %429 = vmatpush2.msra.mxu0 0.0
    %430 = vmatprep.subr.mxu0 0.0
    %431 = vmatpush2.msra.mxu0 0.0
    %432 = vmatprep.subr.mxu0 0.0
    %433 = vmatpush2.msra.mxu0 0.0
    %434 = vmatprep.subr.mxu0 0.0
    %435 = vmatpush2.msra.mxu0 0.0
    %436 = vmatprep.subr.mxu0 0.0
    %437 = vmatpush2.msra.mxu0 0.0
    %438 = vmatprep.subr.mxu0 0.0
    %439 = vmatpush2.msra.mxu0 0.0
    %440 = vmatprep.subr.mxu0 0.0
    %441 = vmatpush2.msra.mxu0 0.0
    %442 = vmatprep.subr.mxu0 0.0
    %443 = vmatpush2.msra.mxu0 0.0
    %444 = vmatprep.subr.mxu0 0.0
    %445 = vmatpush2.msra.mxu0 0.0
    %446 = vmatprep.subr.mxu0 0.0
    %447 = vmatpush2.msra.mxu0 0.0
    %448 = vmatprep.mubr.f32.mxu0 0.0
    %v449 = vand.u32 %v192, 4294901760
    %450 = vmatmul.mubr.f32.gmra.mxu0 %v449
    %v451 = vpop.f32.mrf.mxu0
    %v452 = vadd.f32 %v287, %v451
    %v453 = vpop.f32.mrf.mxu0
    %v454 = vadd.f32 %v289, %v453
    %455 = vmatprep.mubr.f32.mxu0 0.0
    %v456 = vand.u32 %v195, 4294901760
    %457 = vmatmul.mubr.f32.gmra.mxu0 %v456
    %v458 = vpop.f32.mrf.mxu0
    %v459 = vadd.f32 %v298, %v458
    %v460 = vpop.f32.mrf.mxu0
    %v461 = vadd.f32 %v300, %v460
    %462 = vmatprep.mubr.f32.mxu0 0.0
    %v463 = vand.u32 %v198, 4294901760
    %464 = vmatmul.mubr.f32.gmra.mxu0 %v463
    %v465 = vpop.f32.mrf.mxu0
    %v466 = vadd.f32 %v309, %v465
    %v467 = vpop.f32.mrf.mxu0
    %v468 = vadd.f32 %v311, %v467
    %469 = vmatprep.mubr.f32.mxu0 0.0
    %v470 = vand.u32 %v201, 4294901760
    %471 = vmatmul.mubr.f32.gmra.mxu0 %v470
    %v472 = vpop.f32.mrf.mxu0
    %v473 = vadd.f32 %v320, %v472
    %v474 = vpop.f32.mrf.mxu0
    %v475 = vadd.f32 %v322, %v474
    %476 = vdwg.mxu0
    %477 = vmatprep.subr.mxu0 0.0
    %478 = vmatpush1.msra.mxu0 0.0
    %479 = vmatprep.subr.mxu0 0.0
    %480 = vmatpush1.msra.mxu0 0.0
    %481 = vmatprep.subr.mxu0 0.0
    %482 = vmatpush1.msra.mxu0 0.0
    %483 = vmatprep.subr.mxu0 0.0
    %484 = vmatpush1.msra.mxu0 0.0
    %485 = vmatprep.subr.mxu0 0.0
    %486 = vmatpush1.msra.mxu0 0.0
    %487 = vmatprep.subr.mxu0 0.0
    %488 = vmatpush1.msra.mxu0 0.0
    %489 = vmatprep.subr.mxu0 0.0
    %490 = vmatpush1.msra.mxu0 0.0
    %491 = vmatprep.subr.mxu0 0.0
    %492 = vmatpush1.msra.mxu0 0.0
    %493 = vmatprep.subr.mxu0 0.0
    %494 = vmatpush1.msra.mxu0 0.0
    %495 = vmatprep.subr.mxu0 0.0
    %496 = vmatpush1.msra.mxu0 0.0
    %v497 = vand.u32 %v165, 4294901760
    %v498 = vsub.f32 %v165, %v497
    %499 = vmatprep.subr.mxu0 %v498
    %v500 = vand.u32 %v164, 4294901760
    %v501 = vsub.f32 %v164, %v500
    %502 = vmatpush1.msra.mxu0 %v501
    %v503 = vand.u32 %v161, 4294901760
    %v504 = vsub.f32 %v161, %v503
    %505 = vmatprep.subr.mxu0 %v504
    %v506 = vand.u32 %v160, 4294901760
    %v507 = vsub.f32 %v160, %v506
    %508 = vmatpush1.msra.mxu0 %v507
    %v509 = vand.u32 %v157, 4294901760
    %v510 = vsub.f32 %v157, %v509
    %511 = vmatprep.subr.mxu0 %v510
    %v512 = vand.u32 %v156, 4294901760
    %v513 = vsub.f32 %v156, %v512
    %514 = vmatpush1.msra.mxu0 %v513
    %v515 = vand.u32 %v153, 4294901760
    %v516 = vsub.f32 %v153, %v515
    %517 = vmatprep.subr.mxu0 %v516
    %v518 = vand.u32 %v152, 4294901760
    %v519 = vsub.f32 %v152, %v518
    %520 = vmatpush1.msra.mxu0 %v519
    %v521 = vand.u32 %v149, 4294901760
    %v522 = vsub.f32 %v149, %v521
    %523 = vmatprep.subr.mxu0 %v522
    %v524 = vand.u32 %v148, 4294901760
    %v525 = vsub.f32 %v148, %v524
    %526 = vmatpush1.msra.mxu0 %v525
    %v527 = vand.u32 %v145, 4294901760
    %v528 = vsub.f32 %v145, %v527
    %529 = vmatprep.subr.mxu0 %v528
    %v530 = vand.u32 %v144, 4294901760
    %v531 = vsub.f32 %v144, %v530
    %532 = vmatpush1.msra.mxu0 %v531
    %533 = vmatprep.subr.mxu0 0.0
    %534 = vmatpush2.msra.mxu0 0.0
    %535 = vmatprep.subr.mxu0 0.0
    %536 = vmatpush2.msra.mxu0 0.0
    %537 = vmatprep.subr.mxu0 0.0
    %538 = vmatpush2.msra.mxu0 0.0
    %539 = vmatprep.subr.mxu0 0.0
    %540 = vmatpush2.msra.mxu0 0.0
    %541 = vmatprep.subr.mxu0 0.0
    %542 = vmatpush2.msra.mxu0 0.0
    %543 = vmatprep.subr.mxu0 0.0
    %544 = vmatpush2.msra.mxu0 0.0
    %545 = vmatprep.subr.mxu0 0.0
    %546 = vmatpush2.msra.mxu0 0.0
    %547 = vmatprep.subr.mxu0 0.0
    %548 = vmatpush2.msra.mxu0 0.0
    %549 = vmatprep.subr.mxu0 0.0
    %550 = vmatpush2.msra.mxu0 0.0
    %551 = vmatprep.subr.mxu0 0.0
    %552 = vmatpush2.msra.mxu0 0.0
    %553 = vmatprep.subr.mxu0 0.0
    %554 = vmatpush2.msra.mxu0 0.0
    %555 = vmatprep.subr.mxu0 0.0
    %556 = vmatpush2.msra.mxu0 0.0
    %557 = vmatprep.subr.mxu0 0.0
    %558 = vmatpush2.msra.mxu0 0.0
    %559 = vmatprep.subr.mxu0 0.0
    %560 = vmatpush2.msra.mxu0 0.0
    %561 = vmatprep.subr.mxu0 0.0
    %562 = vmatpush2.msra.mxu0 0.0
    %563 = vmatprep.subr.mxu0 0.0
    %564 = vmatpush2.msra.mxu0 0.0
    %565 = vmatprep.mubr.f32.mxu0 0.0
    %v566 = vand.u32 %v192, 4294901760
    %v567 = vsub.f32 %v192, %v566
    %568 = vmatmul.mubr.f32.gmra.mxu0 %v567
    %v569 = vpop.f32.mrf.mxu0
    %v570 = vadd.f32 %v452, %v569
    %v571 = vpop.f32.mrf.mxu0
    %v572 = vadd.f32 %v454, %v571
    %573 = vmatprep.mubr.f32.mxu0 0.0
    %v574 = vand.u32 %v195, 4294901760
    %v575 = vsub.f32 %v195, %v574
    %576 = vmatmul.mubr.f32.gmra.mxu0 %v575
    %v577 = vpop.f32.mrf.mxu0
    %v578 = vadd.f32 %v459, %v577
    %v579 = vpop.f32.mrf.mxu0
    %v580 = vadd.f32 %v461, %v579
    %581 = vmatprep.mubr.f32.mxu0 0.0
    %v582 = vand.u32 %v198, 4294901760
    %v583 = vsub.f32 %v198, %v582
    %584 = vmatmul.mubr.f32.gmra.mxu0 %v583
    %v585 = vpop.f32.mrf.mxu0
    %v586 = vadd.f32 %v466, %v585
    %v587 = vpop.f32.mrf.mxu0
    %v588 = vadd.f32 %v468, %v587
    %589 = vmatprep.mubr.f32.mxu0 0.0
    %v590 = vand.u32 %v201, 4294901760
    %v591 = vsub.f32 %v201, %v590
    %592 = vmatmul.mubr.f32.gmra.mxu0 %v591
    %v593 = vpop.f32.mrf.mxu0
    %v594 = vadd.f32 %v473, %v593
    %v595 = vpop.f32.mrf.mxu0
    %v596 = vadd.f32 %v475, %v595
    %597 = vdwg.mxu0
    %598 = vmatprep.subr.mxu0 0.0
    %599 = vmatpush1.msra.mxu0 0.0
    %600 = vmatprep.subr.mxu0 0.0
    %601 = vmatpush1.msra.mxu0 0.0
    %602 = vmatprep.subr.mxu0 0.0
    %603 = vmatpush1.msra.mxu0 0.0
    %604 = vmatprep.subr.mxu0 0.0
    %605 = vmatpush1.msra.mxu0 0.0
    %606 = vmatprep.subr.mxu0 0.0
    %607 = vmatpush1.msra.mxu0 0.0
    %608 = vmatprep.subr.mxu0 0.0
    %609 = vmatpush1.msra.mxu0 0.0
    %610 = vmatprep.subr.mxu0 0.0
    %611 = vmatpush1.msra.mxu0 0.0
    %612 = vmatprep.subr.mxu0 0.0
    %613 = vmatpush1.msra.mxu0 0.0
    %614 = vmatprep.subr.mxu0 0.0
    %615 = vmatpush1.msra.mxu0 0.0
    %616 = vmatprep.subr.mxu0 0.0
    %617 = vmatpush1.msra.mxu0 0.0
    %v618 = vand.u32 %v165, 4294901760
    %619 = vmatprep.subr.mxu0 %v618
    %v620 = vand.u32 %v164, 4294901760
    %621 = vmatpush1.msra.mxu0 %v620
    %v622 = vand.u32 %v161, 4294901760
    %623 = vmatprep.subr.mxu0 %v622
    %v624 = vand.u32 %v160, 4294901760
    %625 = vmatpush1.msra.mxu0 %v624
    %v626 = vand.u32 %v157, 4294901760
    %627 = vmatprep.subr.mxu0 %v626
    %v628 = vand.u32 %v156, 4294901760
    %629 = vmatpush1.msra.mxu0 %v628
    %v630 = vand.u32 %v153, 4294901760
    %631 = vmatprep.subr.mxu0 %v630
    %v632 = vand.u32 %v152, 4294901760
    %633 = vmatpush1.msra.mxu0 %v632
    %v634 = vand.u32 %v149, 4294901760
    %635 = vmatprep.subr.mxu0 %v634
    %v636 = vand.u32 %v148, 4294901760
    %637 = vmatpush1.msra.mxu0 %v636
    %v638 = vand.u32 %v145, 4294901760
    %639 = vmatprep.subr.mxu0 %v638
    %v640 = vand.u32 %v144, 4294901760
    %641 = vmatpush1.msra.mxu0 %v640
    %642 = vmatprep.subr.mxu0 0.0
    %643 = vmatpush2.msra.mxu0 0.0
    %644 = vmatprep.subr.mxu0 0.0
    %645 = vmatpush2.msra.mxu0 0.0
    %646 = vmatprep.subr.mxu0 0.0
    %647 = vmatpush2.msra.mxu0 0.0
    %648 = vmatprep.subr.mxu0 0.0
    %649 = vmatpush2.msra.mxu0 0.0
    %650 = vmatprep.subr.mxu0 0.0
    %651 = vmatpush2.msra.mxu0 0.0
    %652 = vmatprep.subr.mxu0 0.0
    %653 = vmatpush2.msra.mxu0 0.0
    %654 = vmatprep.subr.mxu0 0.0
    %655 = vmatpush2.msra.mxu0 0.0
    %656 = vmatprep.subr.mxu0 0.0
    %657 = vmatpush2.msra.mxu0 0.0
    %658 = vmatprep.subr.mxu0 0.0
    %659 = vmatpush2.msra.mxu0 0.0
    %660 = vmatprep.subr.mxu0 0.0
    %661 = vmatpush2.msra.mxu0 0.0
    %662 = vmatprep.subr.mxu0 0.0
    %663 = vmatpush2.msra.mxu0 0.0
    %664 = vmatprep.subr.mxu0 0.0
    %665 = vmatpush2.msra.mxu0 0.0
    %666 = vmatprep.subr.mxu0 0.0
    %667 = vmatpush2.msra.mxu0 0.0
    %668 = vmatprep.subr.mxu0 0.0
    %669 = vmatpush2.msra.mxu0 0.0
    %670 = vmatprep.subr.mxu0 0.0
    %671 = vmatpush2.msra.mxu0 0.0
    %672 = vmatprep.subr.mxu0 0.0
    %673 = vmatpush2.msra.mxu0 0.0
    %674 = vmatprep.mubr.f32.mxu0 0.0
    %v675 = vand.u32 %v192, 4294901760
    %v676 = vsub.f32 %v192, %v675
    %v677 = vand.u32 %v676, 4294901760
    %678 = vmatmul.mubr.f32.gmra.mxu0 %v677
    %v679 = vpop.f32.mrf.mxu0
    %v680 = vadd.f32 %v570, %v679
    %v681 = vpop.f32.mrf.mxu0
    %v682 = vadd.f32 %v572, %v681
    %683 = vmatprep.mubr.f32.mxu0 0.0
    %v684 = vand.u32 %v195, 4294901760
    %v685 = vsub.f32 %v195, %v684
    %v686 = vand.u32 %v685, 4294901760
    %687 = vmatmul.mubr.f32.gmra.mxu0 %v686
    %v688 = vpop.f32.mrf.mxu0
    %v689 = vadd.f32 %v578, %v688
    %v690 = vpop.f32.mrf.mxu0
    %v691 = vadd.f32 %v580, %v690
    %692 = vmatprep.mubr.f32.mxu0 0.0
    %v693 = vand.u32 %v198, 4294901760
    %v694 = vsub.f32 %v198, %v693
    %v695 = vand.u32 %v694, 4294901760
    %696 = vmatmul.mubr.f32.gmra.mxu0 %v695
    %v697 = vpop.f32.mrf.mxu0
    %v698 = vadd.f32 %v586, %v697
    %v699 = vpop.f32.mrf.mxu0
    %v700 = vadd.f32 %v588, %v699
    %701 = vmatprep.mubr.f32.mxu0 0.0
    %v702 = vand.u32 %v201, 4294901760
    %v703 = vsub.f32 %v201, %v702
    %v704 = vand.u32 %v703, 4294901760
    %705 = vmatmul.mubr.f32.gmra.mxu0 %v704
    %v706 = vpop.f32.mrf.mxu0
    %v707 = vadd.f32 %v594, %v706
    %v708 = vpop.f32.mrf.mxu0
    %v709 = vadd.f32 %v596, %v708
    %710 = vdwg.mxu0
    %711 = vmatprep.subr.mxu0 0.0
    %712 = vmatpush1.msra.mxu0 0.0
    %713 = vmatprep.subr.mxu0 0.0
    %714 = vmatpush1.msra.mxu0 0.0
    %715 = vmatprep.subr.mxu0 0.0
    %716 = vmatpush1.msra.mxu0 0.0
    %717 = vmatprep.subr.mxu0 0.0
    %718 = vmatpush1.msra.mxu0 0.0
    %719 = vmatprep.subr.mxu0 0.0
    %720 = vmatpush1.msra.mxu0 0.0
    %721 = vmatprep.subr.mxu0 0.0
    %722 = vmatpush1.msra.mxu0 0.0
    %723 = vmatprep.subr.mxu0 0.0
    %724 = vmatpush1.msra.mxu0 0.0
    %725 = vmatprep.subr.mxu0 0.0
    %726 = vmatpush1.msra.mxu0 0.0
    %727 = vmatprep.subr.mxu0 0.0
    %728 = vmatpush1.msra.mxu0 0.0
    %729 = vmatprep.subr.mxu0 0.0
    %730 = vmatpush1.msra.mxu0 0.0
    %v731 = vand.u32 %v165, 4294901760
    %v732 = vsub.f32 %v165, %v731
    %v733 = vand.u32 %v732, 4294901760
    %734 = vmatprep.subr.mxu0 %v733
    %v735 = vand.u32 %v164, 4294901760
    %v736 = vsub.f32 %v164, %v735
    %v737 = vand.u32 %v736, 4294901760
    %738 = vmatpush1.msra.mxu0 %v737
    %v739 = vand.u32 %v161, 4294901760
    %v740 = vsub.f32 %v161, %v739
    %v741 = vand.u32 %v740, 4294901760
    %742 = vmatprep.subr.mxu0 %v741
    %v743 = vand.u32 %v160, 4294901760
    %v744 = vsub.f32 %v160, %v743
    %v745 = vand.u32 %v744, 4294901760
    %746 = vmatpush1.msra.mxu0 %v745
    %v747 = vand.u32 %v157, 4294901760
    %v748 = vsub.f32 %v157, %v747
    %v749 = vand.u32 %v748, 4294901760
    %750 = vmatprep.subr.mxu0 %v749
    %v751 = vand.u32 %v156, 4294901760
    %v752 = vsub.f32 %v156, %v751
    %v753 = vand.u32 %v752, 4294901760
    %754 = vmatpush1.msra.mxu0 %v753
    %v755 = vand.u32 %v153, 4294901760
    %v756 = vsub.f32 %v153, %v755
    %v757 = vand.u32 %v756, 4294901760
    %758 = vmatprep.subr.mxu0 %v757
    %v759 = vand.u32 %v152, 4294901760
    %v760 = vsub.f32 %v152, %v759
    %v761 = vand.u32 %v760, 4294901760
    %762 = vmatpush1.msra.mxu0 %v761
    %v763 = vand.u32 %v149, 4294901760
    %v764 = vsub.f32 %v149, %v763
    %v765 = vand.u32 %v764, 4294901760
    %766 = vmatprep.subr.mxu0 %v765
    %v767 = vand.u32 %v148, 4294901760
    %v768 = vsub.f32 %v148, %v767
    %v769 = vand.u32 %v768, 4294901760
    %770 = vmatpush1.msra.mxu0 %v769
    %v771 = vand.u32 %v145, 4294901760
    %v772 = vsub.f32 %v145, %v771
    %v773 = vand.u32 %v772, 4294901760
    %774 = vmatprep.subr.mxu0 %v773
    %v775 = vand.u32 %v144, 4294901760
    %v776 = vsub.f32 %v144, %v775
    %v777 = vand.u32 %v776, 4294901760
    %778 = vmatpush1.msra.mxu0 %v777
    %779 = vmatprep.subr.mxu0 0.0
    %780 = vmatpush2.msra.mxu0 0.0
    %781 = vmatprep.subr.mxu0 0.0
    %782 = vmatpush2.msra.mxu0 0.0
    %783 = vmatprep.subr.mxu0 0.0
    %784 = vmatpush2.msra.mxu0 0.0
    %785 = vmatprep.subr.mxu0 0.0
    %786 = vmatpush2.msra.mxu0 0.0
    %787 = vmatprep.subr.mxu0 0.0
    %788 = vmatpush2.msra.mxu0 0.0
    %789 = vmatprep.subr.mxu0 0.0
    %790 = vmatpush2.msra.mxu0 0.0
    %791 = vmatprep.subr.mxu0 0.0
    %792 = vmatpush2.msra.mxu0 0.0
    %793 = vmatprep.subr.mxu0 0.0
    %794 = vmatpush2.msra.mxu0 0.0
    %795 = vmatprep.subr.mxu0 0.0
    %796 = vmatpush2.msra.mxu0 0.0
    %797 = vmatprep.subr.mxu0 0.0
    %798 = vmatpush2.msra.mxu0 0.0
    %799 = vmatprep.subr.mxu0 0.0
    %800 = vmatpush2.msra.mxu0 0.0
    %801 = vmatprep.subr.mxu0 0.0
    %802 = vmatpush2.msra.mxu0 0.0
    %803 = vmatprep.subr.mxu0 0.0
    %804 = vmatpush2.msra.mxu0 0.0
    %805 = vmatprep.subr.mxu0 0.0
    %806 = vmatpush2.msra.mxu0 0.0
    %807 = vmatprep.subr.mxu0 0.0
    %808 = vmatpush2.msra.mxu0 0.0
    %809 = vmatprep.subr.mxu0 0.0
    %810 = vmatpush2.msra.mxu0 0.0
    %811 = vmatprep.mubr.f32.mxu0 0.0
    %v812 = vand.u32 %v192, 4294901760
    %813 = vmatmul.mubr.f32.gmra.mxu0 %v812
    %v814 = vpop.f32.mrf.mxu0
    %v815 = vadd.f32 %v680, %v814
    %v816 = vpop.f32.mrf.mxu0
    %v817 = vadd.f32 %v682, %v816
    %818 = vmatprep.mubr.f32.mxu0 0.0
    %v819 = vand.u32 %v195, 4294901760
    %820 = vmatmul.mubr.f32.gmra.mxu0 %v819
    %v821 = vpop.f32.mrf.mxu0
    %v822 = vadd.f32 %v689, %v821
    %v823 = vpop.f32.mrf.mxu0
    %v824 = vadd.f32 %v691, %v823
    %825 = vmatprep.mubr.f32.mxu0 0.0
    %v826 = vand.u32 %v198, 4294901760
    %827 = vmatmul.mubr.f32.gmra.mxu0 %v826
    %v828 = vpop.f32.mrf.mxu0
    %v829 = vadd.f32 %v698, %v828
    %v830 = vpop.f32.mrf.mxu0
    %v831 = vadd.f32 %v700, %v830
    %832 = vmatprep.mubr.f32.mxu0 0.0
    %v833 = vand.u32 %v201, 4294901760
    %834 = vmatmul.mubr.f32.gmra.mxu0 %v833
    %v835 = vpop.f32.mrf.mxu0
    %v836 = vadd.f32 %v707, %v835
    %v837 = vpop.f32.mrf.mxu0
    %v838 = vadd.f32 %v709, %v837
    %839 = vdwg.mxu0
    %840 = vmatprep.subr.mxu0 0.0
    %841 = vmatpush1.msra.mxu0 0.0
    %842 = vmatprep.subr.mxu0 0.0
    %843 = vmatpush1.msra.mxu0 0.0
    %844 = vmatprep.subr.mxu0 0.0
    %845 = vmatpush1.msra.mxu0 0.0
    %846 = vmatprep.subr.mxu0 0.0
    %847 = vmatpush1.msra.mxu0 0.0
    %848 = vmatprep.subr.mxu0 0.0
    %849 = vmatpush1.msra.mxu0 0.0
    %850 = vmatprep.subr.mxu0 0.0
    %851 = vmatpush1.msra.mxu0 0.0
    %852 = vmatprep.subr.mxu0 0.0
    %853 = vmatpush1.msra.mxu0 0.0
    %854 = vmatprep.subr.mxu0 0.0
    %855 = vmatpush1.msra.mxu0 0.0
    %856 = vmatprep.subr.mxu0 0.0
    %857 = vmatpush1.msra.mxu0 0.0
    %858 = vmatprep.subr.mxu0 0.0
    %859 = vmatpush1.msra.mxu0 0.0
    %v860 = vand.u32 %v165, 4294901760
    %861 = vmatprep.subr.mxu0 %v860
    %v862 = vand.u32 %v164, 4294901760
    %863 = vmatpush1.msra.mxu0 %v862
    %v864 = vand.u32 %v161, 4294901760
    %865 = vmatprep.subr.mxu0 %v864
    %v866 = vand.u32 %v160, 4294901760
    %867 = vmatpush1.msra.mxu0 %v866
    %v868 = vand.u32 %v157, 4294901760
    %869 = vmatprep.subr.mxu0 %v868
    %v870 = vand.u32 %v156, 4294901760
    %871 = vmatpush1.msra.mxu0 %v870
    %v872 = vand.u32 %v153, 4294901760
    %873 = vmatprep.subr.mxu0 %v872
    %v874 = vand.u32 %v152, 4294901760
    %875 = vmatpush1.msra.mxu0 %v874
    %v876 = vand.u32 %v149, 4294901760
    %877 = vmatprep.subr.mxu0 %v876
    %v878 = vand.u32 %v148, 4294901760
    %879 = vmatpush1.msra.mxu0 %v878
    %v880 = vand.u32 %v145, 4294901760
    %881 = vmatprep.subr.mxu0 %v880
    %v882 = vand.u32 %v144, 4294901760
    %883 = vmatpush1.msra.mxu0 %v882
    %884 = vmatprep.subr.mxu0 0.0
    %885 = vmatpush2.msra.mxu0 0.0
    %886 = vmatprep.subr.mxu0 0.0
    %887 = vmatpush2.msra.mxu0 0.0
    %888 = vmatprep.subr.mxu0 0.0
    %889 = vmatpush2.msra.mxu0 0.0
    %890 = vmatprep.subr.mxu0 0.0
    %891 = vmatpush2.msra.mxu0 0.0
    %892 = vmatprep.subr.mxu0 0.0
    %893 = vmatpush2.msra.mxu0 0.0
    %894 = vmatprep.subr.mxu0 0.0
    %895 = vmatpush2.msra.mxu0 0.0
    %896 = vmatprep.subr.mxu0 0.0
    %897 = vmatpush2.msra.mxu0 0.0
    %898 = vmatprep.subr.mxu0 0.0
    %899 = vmatpush2.msra.mxu0 0.0
    %900 = vmatprep.subr.mxu0 0.0
    %901 = vmatpush2.msra.mxu0 0.0
    %902 = vmatprep.subr.mxu0 0.0
    %903 = vmatpush2.msra.mxu0 0.0
    %904 = vmatprep.subr.mxu0 0.0
    %905 = vmatpush2.msra.mxu0 0.0
    %906 = vmatprep.subr.mxu0 0.0
    %907 = vmatpush2.msra.mxu0 0.0
    %908 = vmatprep.subr.mxu0 0.0
    %909 = vmatpush2.msra.mxu0 0.0
    %910 = vmatprep.subr.mxu0 0.0
    %911 = vmatpush2.msra.mxu0 0.0
    %912 = vmatprep.subr.mxu0 0.0
    %913 = vmatpush2.msra.mxu0 0.0
    %914 = vmatprep.subr.mxu0 0.0
    %915 = vmatpush2.msra.mxu0 0.0
    %916 = vmatprep.mubr.f32.mxu0 0.0
    %v917 = vand.u32 %v192, 4294901760
    %918 = vmatmul.mubr.f32.gmra.mxu0 %v917
    %v919 = vpop.f32.mrf.mxu0
    %v920 = vadd.f32 %v815, %v919
    %v921 = vpop.f32.mrf.mxu0
    %v922 = vadd.f32 %v817, %v921
    %923 = vmatprep.mubr.f32.mxu0 0.0
    %v924 = vand.u32 %v195, 4294901760
    %925 = vmatmul.mubr.f32.gmra.mxu0 %v924
    %v926 = vpop.f32.mrf.mxu0
    %v927 = vadd.f32 %v822, %v926
    %v928 = vpop.f32.mrf.mxu0
    %v929 = vadd.f32 %v824, %v928
    %930 = vmatprep.mubr.f32.mxu0 0.0
    %v931 = vand.u32 %v198, 4294901760
    %932 = vmatmul.mubr.f32.gmra.mxu0 %v931
    %v933 = vpop.f32.mrf.mxu0
    %v934 = vadd.f32 %v829, %v933
    %v935 = vpop.f32.mrf.mxu0
    %v936 = vadd.f32 %v831, %v935
    %937 = vmatprep.mubr.f32.mxu0 0.0
    %v938 = vand.u32 %v201, 4294901760
    %939 = vmatmul.mubr.f32.gmra.mxu0 %v938
    %v940 = vpop.f32.mrf.mxu0
    %v941 = vadd.f32 %v836, %v940
    %v942 = vpop.f32.mrf.mxu0
    %v943 = vadd.f32 %v838, %v942
    %944 = vdwg.mxu0
    %945 = vmatprep.subr.mxu0 0.0
    %946 = vmatpush1.msra.mxu0 0.0
    %947 = vmatprep.subr.mxu0 0.0
    %948 = vmatpush1.msra.mxu0 0.0
    %949 = vmatprep.subr.mxu0 0.0
    %950 = vmatpush1.msra.mxu0 0.0
    %951 = vmatprep.subr.mxu0 0.0
    %952 = vmatpush1.msra.mxu0 0.0
    %953 = vmatprep.subr.mxu0 0.0
    %954 = vmatpush1.msra.mxu0 0.0
    %955 = vmatprep.subr.mxu0 0.0
    %956 = vmatpush1.msra.mxu0 0.0
    %957 = vmatprep.subr.mxu0 0.0
    %958 = vmatpush1.msra.mxu0 0.0
    %959 = vmatprep.subr.mxu0 0.0
    %960 = vmatpush1.msra.mxu0 0.0
    %961 = vmatprep.subr.mxu0 0.0
    %962 = vmatpush1.msra.mxu0 0.0
    %963 = vmatprep.subr.mxu0 0.0
    %964 = vmatpush1.msra.mxu0 0.0
    %v965 = vand.u32 %v167, 4294901760
    %966 = vmatprep.subr.mxu0 %v965
    %v967 = vand.u32 %v166, 4294901760
    %968 = vmatpush1.msra.mxu0 %v967
    %v969 = vand.u32 %v163, 4294901760
    %970 = vmatprep.subr.mxu0 %v969
    %v971 = vand.u32 %v162, 4294901760
    %972 = vmatpush1.msra.mxu0 %v971
    %v973 = vand.u32 %v159, 4294901760
    %974 = vmatprep.subr.mxu0 %v973
    %v975 = vand.u32 %v158, 4294901760
    %976 = vmatpush1.msra.mxu0 %v975
    %v977 = vand.u32 %v155, 4294901760
    %978 = vmatprep.subr.mxu0 %v977
    %v979 = vand.u32 %v154, 4294901760
    %980 = vmatpush1.msra.mxu0 %v979
    %v981 = vand.u32 %v151, 4294901760
    %982 = vmatprep.subr.mxu0 %v981
    %v983 = vand.u32 %v150, 4294901760
    %984 = vmatpush1.msra.mxu0 %v983
    %v985 = vand.u32 %v147, 4294901760
    %986 = vmatprep.subr.mxu0 %v985
    %v987 = vand.u32 %v146, 4294901760
    %988 = vmatpush1.msra.mxu0 %v987
    %989 = vmatprep.subr.mxu0 0.0
    %990 = vmatpush2.msra.mxu0 0.0
    %991 = vmatprep.subr.mxu0 0.0
    %992 = vmatpush2.msra.mxu0 0.0
    %993 = vmatprep.subr.mxu0 0.0
    %994 = vmatpush2.msra.mxu0 0.0
    %995 = vmatprep.subr.mxu0 0.0
    %996 = vmatpush2.msra.mxu0 0.0
    %997 = vmatprep.subr.mxu0 0.0
    %998 = vmatpush2.msra.mxu0 0.0
    %999 = vmatprep.subr.mxu0 0.0
    %1000 = vmatpush2.msra.mxu0 0.0
    %1001 = vmatprep.subr.mxu0 0.0
    %1002 = vmatpush2.msra.mxu0 0.0
    %1003 = vmatprep.subr.mxu0 0.0
    %1004 = vmatpush2.msra.mxu0 0.0
    %1005 = vmatprep.subr.mxu0 0.0
    %1006 = vmatpush2.msra.mxu0 0.0
    %1007 = vmatprep.subr.mxu0 0.0
    %1008 = vmatpush2.msra.mxu0 0.0
    %1009 = vmatprep.subr.mxu0 0.0
    %1010 = vmatpush2.msra.mxu0 0.0
    %1011 = vmatprep.subr.mxu0 0.0
    %1012 = vmatpush2.msra.mxu0 0.0
    %1013 = vmatprep.subr.mxu0 0.0
    %1014 = vmatpush2.msra.mxu0 0.0
    %1015 = vmatprep.subr.mxu0 0.0
    %1016 = vmatpush2.msra.mxu0 0.0
    %1017 = vmatprep.subr.mxu0 0.0
    %1018 = vmatpush2.msra.mxu0 0.0
    %1019 = vmatprep.subr.mxu0 0.0
    %1020 = vmatpush2.msra.mxu0 0.0
    %1021 = vmatprep.mubr.f32.mxu0 0.0
    %v1022 = vand.u32 %v192, 4294901760
    %v1023 = vsub.f32 %v192, %v1022
    %v1024 = vand.u32 %v1023, 4294901760
    %v1025 = vsub.f32 %v1023, %v1024
    %v1026 = vand.u32 %v1025, 4294901760
    %1027 = vmatmul.mubr.f32.gmra.mxu0 %v1026
    %v1028 = vpop.f32.mrf.mxu0
    %v1029 = vadd.f32 %v181, %v1028
    %v1030 = vpop.f32.mrf.mxu0
    %v1031 = vadd.f32 %v185, %v1030
    %1032 = vmatprep.mubr.f32.mxu0 0.0
    %v1033 = vand.u32 %v195, 4294901760
    %v1034 = vsub.f32 %v195, %v1033
    %v1035 = vand.u32 %v1034, 4294901760
    %v1036 = vsub.f32 %v1034, %v1035
    %v1037 = vand.u32 %v1036, 4294901760
    %1038 = vmatmul.mubr.f32.gmra.mxu0 %v1037
    %v1039 = vpop.f32.mrf.mxu0
    %v1040 = vadd.f32 %v181, %v1039
    %v1041 = vpop.f32.mrf.mxu0
    %v1042 = vadd.f32 %v185, %v1041
    %1043 = vmatprep.mubr.f32.mxu0 0.0
    %v1044 = vand.u32 %v198, 4294901760
    %v1045 = vsub.f32 %v198, %v1044
    %v1046 = vand.u32 %v1045, 4294901760
    %v1047 = vsub.f32 %v1045, %v1046
    %v1048 = vand.u32 %v1047, 4294901760
    %1049 = vmatmul.mubr.f32.gmra.mxu0 %v1048
    %v1050 = vpop.f32.mrf.mxu0
    %v1051 = vadd.f32 %v181, %v1050
    %v1052 = vpop.f32.mrf.mxu0
    %v1053 = vadd.f32 %v185, %v1052
    %1054 = vmatprep.mubr.f32.mxu0 0.0
    %v1055 = vand.u32 %v201, 4294901760
    %v1056 = vsub.f32 %v201, %v1055
    %v1057 = vand.u32 %v1056, 4294901760
    %v1058 = vsub.f32 %v1056, %v1057
    %v1059 = vand.u32 %v1058, 4294901760
    %1060 = vmatmul.mubr.f32.gmra.mxu0 %v1059
    %v1061 = vpop.f32.mrf.mxu0
    %v1062 = vadd.f32 %v181, %v1061
    %v1063 = vpop.f32.mrf.mxu0
    %v1064 = vadd.f32 %v185, %v1063
    %1065 = vdwg.mxu0
    %1066 = vmatprep.subr.mxu0 0.0
    %1067 = vmatpush1.msra.mxu0 0.0
    %1068 = vmatprep.subr.mxu0 0.0
    %1069 = vmatpush1.msra.mxu0 0.0
    %1070 = vmatprep.subr.mxu0 0.0
    %1071 = vmatpush1.msra.mxu0 0.0
    %1072 = vmatprep.subr.mxu0 0.0
    %1073 = vmatpush1.msra.mxu0 0.0
    %1074 = vmatprep.subr.mxu0 0.0
    %1075 = vmatpush1.msra.mxu0 0.0
    %1076 = vmatprep.subr.mxu0 0.0
    %1077 = vmatpush1.msra.mxu0 0.0
    %1078 = vmatprep.subr.mxu0 0.0
    %1079 = vmatpush1.msra.mxu0 0.0
    %1080 = vmatprep.subr.mxu0 0.0
    %1081 = vmatpush1.msra.mxu0 0.0
    %1082 = vmatprep.subr.mxu0 0.0
    %1083 = vmatpush1.msra.mxu0 0.0
    %1084 = vmatprep.subr.mxu0 0.0
    %1085 = vmatpush1.msra.mxu0 0.0
    %v1086 = vand.u32 %v167, 4294901760
    %v1087 = vsub.f32 %v167, %v1086
    %v1088 = vand.u32 %v1087, 4294901760
    %v1089 = vsub.f32 %v1087, %v1088
    %v1090 = vand.u32 %v1089, 4294901760
    %1091 = vmatprep.subr.mxu0 %v1090
    %v1092 = vand.u32 %v166, 4294901760
    %v1093 = vsub.f32 %v166, %v1092
    %v1094 = vand.u32 %v1093, 4294901760
    %v1095 = vsub.f32 %v1093, %v1094
    %v1096 = vand.u32 %v1095, 4294901760
    %1097 = vmatpush1.msra.mxu0 %v1096
    %v1098 = vand.u32 %v163, 4294901760
    %v1099 = vsub.f32 %v163, %v1098
    %v1100 = vand.u32 %v1099, 4294901760
    %v1101 = vsub.f32 %v1099, %v1100
    %v1102 = vand.u32 %v1101, 4294901760
    %1103 = vmatprep.subr.mxu0 %v1102
    %v1104 = vand.u32 %v162, 4294901760
    %v1105 = vsub.f32 %v162, %v1104
    %v1106 = vand.u32 %v1105, 4294901760
    %v1107 = vsub.f32 %v1105, %v1106
    %v1108 = vand.u32 %v1107, 4294901760
    %1109 = vmatpush1.msra.mxu0 %v1108
    %v1110 = vand.u32 %v159, 4294901760
    %v1111 = vsub.f32 %v159, %v1110
    %v1112 = vand.u32 %v1111, 4294901760
    %v1113 = vsub.f32 %v1111, %v1112
    %v1114 = vand.u32 %v1113, 4294901760
    %1115 = vmatprep.subr.mxu0 %v1114
    %v1116 = vand.u32 %v158, 4294901760
    %v1117 = vsub.f32 %v158, %v1116
    %v1118 = vand.u32 %v1117, 4294901760
    %v1119 = vsub.f32 %v1117, %v1118
    %v1120 = vand.u32 %v1119, 4294901760
    %1121 = vmatpush1.msra.mxu0 %v1120
    %v1122 = vand.u32 %v155, 4294901760
    %v1123 = vsub.f32 %v155, %v1122
    %v1124 = vand.u32 %v1123, 4294901760
    %v1125 = vsub.f32 %v1123, %v1124
    %v1126 = vand.u32 %v1125, 4294901760
    %1127 = vmatprep.subr.mxu0 %v1126
    %v1128 = vand.u32 %v154, 4294901760
    %v1129 = vsub.f32 %v154, %v1128
    %v1130 = vand.u32 %v1129, 4294901760
    %v1131 = vsub.f32 %v1129, %v1130
    %v1132 = vand.u32 %v1131, 4294901760
    %1133 = vmatpush1.msra.mxu0 %v1132
    %v1134 = vand.u32 %v151, 4294901760
    %v1135 = vsub.f32 %v151, %v1134
    %v1136 = vand.u32 %v1135, 4294901760
    %v1137 = vsub.f32 %v1135, %v1136
    %v1138 = vand.u32 %v1137, 4294901760
    %1139 = vmatprep.subr.mxu0 %v1138
    %v1140 = vand.u32 %v150, 4294901760
    %v1141 = vsub.f32 %v150, %v1140
    %v1142 = vand.u32 %v1141, 4294901760
    %v1143 = vsub.f32 %v1141, %v1142
    %v1144 = vand.u32 %v1143, 4294901760
    %1145 = vmatpush1.msra.mxu0 %v1144
    %v1146 = vand.u32 %v147, 4294901760
    %v1147 = vsub.f32 %v147, %v1146
    %v1148 = vand.u32 %v1147, 4294901760
    %v1149 = vsub.f32 %v1147, %v1148
    %v1150 = vand.u32 %v1149, 4294901760
    %1151 = vmatprep.subr.mxu0 %v1150
    %v1152 = vand.u32 %v146, 4294901760
    %v1153 = vsub.f32 %v146, %v1152
    %v1154 = vand.u32 %v1153, 4294901760
    %v1155 = vsub.f32 %v1153, %v1154
    %v1156 = vand.u32 %v1155, 4294901760
    %1157 = vmatpush1.msra.mxu0 %v1156
    %1158 = vmatprep.subr.mxu0 0.0
    %1159 = vmatpush2.msra.mxu0 0.0
    %1160 = vmatprep.subr.mxu0 0.0
    %1161 = vmatpush2.msra.mxu0 0.0
    %1162 = vmatprep.subr.mxu0 0.0
    %1163 = vmatpush2.msra.mxu0 0.0
    %1164 = vmatprep.subr.mxu0 0.0
    %1165 = vmatpush2.msra.mxu0 0.0
    %1166 = vmatprep.subr.mxu0 0.0
    %1167 = vmatpush2.msra.mxu0 0.0
    %1168 = vmatprep.subr.mxu0 0.0
    %1169 = vmatpush2.msra.mxu0 0.0
    %1170 = vmatprep.subr.mxu0 0.0
    %1171 = vmatpush2.msra.mxu0 0.0
    %1172 = vmatprep.subr.mxu0 0.0
    %1173 = vmatpush2.msra.mxu0 0.0
    %1174 = vmatprep.subr.mxu0 0.0
    %1175 = vmatpush2.msra.mxu0 0.0
    %1176 = vmatprep.subr.mxu0 0.0
    %1177 = vmatpush2.msra.mxu0 0.0
    %1178 = vmatprep.subr.mxu0 0.0
    %1179 = vmatpush2.msra.mxu0 0.0
    %1180 = vmatprep.subr.mxu0 0.0
    %1181 = vmatpush2.msra.mxu0 0.0
    %1182 = vmatprep.subr.mxu0 0.0
    %1183 = vmatpush2.msra.mxu0 0.0
    %1184 = vmatprep.subr.mxu0 0.0
    %1185 = vmatpush2.msra.mxu0 0.0
    %1186 = vmatprep.subr.mxu0 0.0
    %1187 = vmatpush2.msra.mxu0 0.0
    %1188 = vmatprep.subr.mxu0 0.0
    %1189 = vmatpush2.msra.mxu0 0.0
    %1190 = vmatprep.mubr.f32.mxu0 0.0
    %v1191 = vand.u32 %v192, 4294901760
    %1192 = vmatmul.mubr.f32.gmra.mxu0 %v1191
    %v1193 = vpop.f32.mrf.mxu0
    %v1194 = vadd.f32 %v1029, %v1193
    %v1195 = vpop.f32.mrf.mxu0
    %v1196 = vadd.f32 %v1031, %v1195
    %1197 = vmatprep.mubr.f32.mxu0 0.0
    %v1198 = vand.u32 %v195, 4294901760
    %1199 = vmatmul.mubr.f32.gmra.mxu0 %v1198
    %v1200 = vpop.f32.mrf.mxu0
    %v1201 = vadd.f32 %v1040, %v1200
    %v1202 = vpop.f32.mrf.mxu0
    %v1203 = vadd.f32 %v1042, %v1202
    %1204 = vmatprep.mubr.f32.mxu0 0.0
    %v1205 = vand.u32 %v198, 4294901760
    %1206 = vmatmul.mubr.f32.gmra.mxu0 %v1205
    %v1207 = vpop.f32.mrf.mxu0
    %v1208 = vadd.f32 %v1051, %v1207
    %v1209 = vpop.f32.mrf.mxu0
    %v1210 = vadd.f32 %v1053, %v1209
    %1211 = vmatprep.mubr.f32.mxu0 0.0
    %v1212 = vand.u32 %v201, 4294901760
    %1213 = vmatmul.mubr.f32.gmra.mxu0 %v1212
    %v1214 = vpop.f32.mrf.mxu0
    %v1215 = vadd.f32 %v1062, %v1214
    %v1216 = vpop.f32.mrf.mxu0
    %v1217 = vadd.f32 %v1064, %v1216
    %1218 = vdwg.mxu0
    %1219 = vmatprep.subr.mxu0 0.0
    %1220 = vmatpush1.msra.mxu0 0.0
    %1221 = vmatprep.subr.mxu0 0.0
    %1222 = vmatpush1.msra.mxu0 0.0
    %1223 = vmatprep.subr.mxu0 0.0
    %1224 = vmatpush1.msra.mxu0 0.0
    %1225 = vmatprep.subr.mxu0 0.0
    %1226 = vmatpush1.msra.mxu0 0.0
    %1227 = vmatprep.subr.mxu0 0.0
    %1228 = vmatpush1.msra.mxu0 0.0
    %1229 = vmatprep.subr.mxu0 0.0
    %1230 = vmatpush1.msra.mxu0 0.0
    %1231 = vmatprep.subr.mxu0 0.0
    %1232 = vmatpush1.msra.mxu0 0.0
    %1233 = vmatprep.subr.mxu0 0.0
    %1234 = vmatpush1.msra.mxu0 0.0
    %1235 = vmatprep.subr.mxu0 0.0
    %1236 = vmatpush1.msra.mxu0 0.0
    %1237 = vmatprep.subr.mxu0 0.0
    %1238 = vmatpush1.msra.mxu0 0.0
    %v1239 = vand.u32 %v167, 4294901760
    %v1240 = vsub.f32 %v167, %v1239
    %1241 = vmatprep.subr.mxu0 %v1240
    %v1242 = vand.u32 %v166, 4294901760
    %v1243 = vsub.f32 %v166, %v1242
    %1244 = vmatpush1.msra.mxu0 %v1243
    %v1245 = vand.u32 %v163, 4294901760
    %v1246 = vsub.f32 %v163, %v1245
    %1247 = vmatprep.subr.mxu0 %v1246
    %v1248 = vand.u32 %v162, 4294901760
    %v1249 = vsub.f32 %v162, %v1248
    %1250 = vmatpush1.msra.mxu0 %v1249
    %v1251 = vand.u32 %v159, 4294901760
    %v1252 = vsub.f32 %v159, %v1251
    %1253 = vmatprep.subr.mxu0 %v1252
    %v1254 = vand.u32 %v158, 4294901760
    %v1255 = vsub.f32 %v158, %v1254
    %1256 = vmatpush1.msra.mxu0 %v1255
    %v1257 = vand.u32 %v155, 4294901760
    %v1258 = vsub.f32 %v155, %v1257
    %1259 = vmatprep.subr.mxu0 %v1258
    %v1260 = vand.u32 %v154, 4294901760
    %v1261 = vsub.f32 %v154, %v1260
    %1262 = vmatpush1.msra.mxu0 %v1261
    %v1263 = vand.u32 %v151, 4294901760
    %v1264 = vsub.f32 %v151, %v1263
    %1265 = vmatprep.subr.mxu0 %v1264
    %v1266 = vand.u32 %v150, 4294901760
    %v1267 = vsub.f32 %v150, %v1266
    %1268 = vmatpush1.msra.mxu0 %v1267
    %v1269 = vand.u32 %v147, 4294901760
    %v1270 = vsub.f32 %v147, %v1269
    %1271 = vmatprep.subr.mxu0 %v1270
    %v1272 = vand.u32 %v146, 4294901760
    %v1273 = vsub.f32 %v146, %v1272
    %1274 = vmatpush1.msra.mxu0 %v1273
    %1275 = vmatprep.subr.mxu0 0.0
    %1276 = vmatpush2.msra.mxu0 0.0
    %1277 = vmatprep.subr.mxu0 0.0
    %1278 = vmatpush2.msra.mxu0 0.0
    %1279 = vmatprep.subr.mxu0 0.0
    %1280 = vmatpush2.msra.mxu0 0.0
    %1281 = vmatprep.subr.mxu0 0.0
    %1282 = vmatpush2.msra.mxu0 0.0
    %1283 = vmatprep.subr.mxu0 0.0
    %1284 = vmatpush2.msra.mxu0 0.0
    %1285 = vmatprep.subr.mxu0 0.0
    %1286 = vmatpush2.msra.mxu0 0.0
    %1287 = vmatprep.subr.mxu0 0.0
    %1288 = vmatpush2.msra.mxu0 0.0
    %1289 = vmatprep.subr.mxu0 0.0
    %1290 = vmatpush2.msra.mxu0 0.0
    %1291 = vmatprep.subr.mxu0 0.0
    %1292 = vmatpush2.msra.mxu0 0.0
    %1293 = vmatprep.subr.mxu0 0.0
    %1294 = vmatpush2.msra.mxu0 0.0
    %1295 = vmatprep.subr.mxu0 0.0
    %1296 = vmatpush2.msra.mxu0 0.0
    %1297 = vmatprep.subr.mxu0 0.0
    %1298 = vmatpush2.msra.mxu0 0.0
    %1299 = vmatprep.subr.mxu0 0.0
    %1300 = vmatpush2.msra.mxu0 0.0
    %1301 = vmatprep.subr.mxu0 0.0
    %1302 = vmatpush2.msra.mxu0 0.0
    %1303 = vmatprep.subr.mxu0 0.0
    %1304 = vmatpush2.msra.mxu0 0.0
    %1305 = vmatprep.subr.mxu0 0.0
    %1306 = vmatpush2.msra.mxu0 0.0
    %1307 = vmatprep.mubr.f32.mxu0 0.0
    %v1308 = vand.u32 %v192, 4294901760
    %v1309 = vsub.f32 %v192, %v1308
    %1310 = vmatmul.mubr.f32.gmra.mxu0 %v1309
    %v1311 = vpop.f32.mrf.mxu0
    %v1312 = vadd.f32 %v1194, %v1311
    %v1313 = vpop.f32.mrf.mxu0
    %v1314 = vadd.f32 %v1196, %v1313
    %1315 = vmatprep.mubr.f32.mxu0 0.0
    %v1316 = vand.u32 %v195, 4294901760
    %v1317 = vsub.f32 %v195, %v1316
    %1318 = vmatmul.mubr.f32.gmra.mxu0 %v1317
    %v1319 = vpop.f32.mrf.mxu0
    %v1320 = vadd.f32 %v1201, %v1319
    %v1321 = vpop.f32.mrf.mxu0
    %v1322 = vadd.f32 %v1203, %v1321
    %1323 = vmatprep.mubr.f32.mxu0 0.0
    %v1324 = vand.u32 %v198, 4294901760
    %v1325 = vsub.f32 %v198, %v1324
    %1326 = vmatmul.mubr.f32.gmra.mxu0 %v1325
    %v1327 = vpop.f32.mrf.mxu0
    %v1328 = vadd.f32 %v1208, %v1327
    %v1329 = vpop.f32.mrf.mxu0
    %v1330 = vadd.f32 %v1210, %v1329
    %1331 = vmatprep.mubr.f32.mxu0 0.0
    %v1332 = vand.u32 %v201, 4294901760
    %v1333 = vsub.f32 %v201, %v1332
    %1334 = vmatmul.mubr.f32.gmra.mxu0 %v1333
    %v1335 = vpop.f32.mrf.mxu0
    %v1336 = vadd.f32 %v1215, %v1335
    %v1337 = vpop.f32.mrf.mxu0
    %v1338 = vadd.f32 %v1217, %v1337
    %1339 = vdwg.mxu0
    %1340 = vmatprep.subr.mxu0 0.0
    %1341 = vmatpush1.msra.mxu0 0.0
    %1342 = vmatprep.subr.mxu0 0.0
    %1343 = vmatpush1.msra.mxu0 0.0
    %1344 = vmatprep.subr.mxu0 0.0
    %1345 = vmatpush1.msra.mxu0 0.0
    %1346 = vmatprep.subr.mxu0 0.0
    %1347 = vmatpush1.msra.mxu0 0.0
    %1348 = vmatprep.subr.mxu0 0.0
    %1349 = vmatpush1.msra.mxu0 0.0
    %1350 = vmatprep.subr.mxu0 0.0
    %1351 = vmatpush1.msra.mxu0 0.0
    %1352 = vmatprep.subr.mxu0 0.0
    %1353 = vmatpush1.msra.mxu0 0.0
    %1354 = vmatprep.subr.mxu0 0.0
    %1355 = vmatpush1.msra.mxu0 0.0
    %1356 = vmatprep.subr.mxu0 0.0
    %1357 = vmatpush1.msra.mxu0 0.0
    %1358 = vmatprep.subr.mxu0 0.0
    %1359 = vmatpush1.msra.mxu0 0.0
    %v1360 = vand.u32 %v167, 4294901760
    %1361 = vmatprep.subr.mxu0 %v1360
    %v1362 = vand.u32 %v166, 4294901760
    %1363 = vmatpush1.msra.mxu0 %v1362
    %v1364 = vand.u32 %v163, 4294901760
    %1365 = vmatprep.subr.mxu0 %v1364
    %v1366 = vand.u32 %v162, 4294901760
    %1367 = vmatpush1.msra.mxu0 %v1366
    %v1368 = vand.u32 %v159, 4294901760
    %1369 = vmatprep.subr.mxu0 %v1368
    %v1370 = vand.u32 %v158, 4294901760
    %1371 = vmatpush1.msra.mxu0 %v1370
    %v1372 = vand.u32 %v155, 4294901760
    %1373 = vmatprep.subr.mxu0 %v1372
    %v1374 = vand.u32 %v154, 4294901760
    %1375 = vmatpush1.msra.mxu0 %v1374
    %v1376 = vand.u32 %v151, 4294901760
    %1377 = vmatprep.subr.mxu0 %v1376
    %v1378 = vand.u32 %v150, 4294901760
    %1379 = vmatpush1.msra.mxu0 %v1378
    %v1380 = vand.u32 %v147, 4294901760
    %1381 = vmatprep.subr.mxu0 %v1380
    %v1382 = vand.u32 %v146, 4294901760
    %1383 = vmatpush1.msra.mxu0 %v1382
    %1384 = vmatprep.subr.mxu0 0.0
    %1385 = vmatpush2.msra.mxu0 0.0
    %1386 = vmatprep.subr.mxu0 0.0
    %1387 = vmatpush2.msra.mxu0 0.0
    %1388 = vmatprep.subr.mxu0 0.0
    %1389 = vmatpush2.msra.mxu0 0.0
    %1390 = vmatprep.subr.mxu0 0.0
    %1391 = vmatpush2.msra.mxu0 0.0
    %1392 = vmatprep.subr.mxu0 0.0
    %1393 = vmatpush2.msra.mxu0 0.0
    %1394 = vmatprep.subr.mxu0 0.0
    %1395 = vmatpush2.msra.mxu0 0.0
    %1396 = vmatprep.subr.mxu0 0.0
    %1397 = vmatpush2.msra.mxu0 0.0
    %1398 = vmatprep.subr.mxu0 0.0
    %1399 = vmatpush2.msra.mxu0 0.0
    %1400 = vmatprep.subr.mxu0 0.0
    %1401 = vmatpush2.msra.mxu0 0.0
    %1402 = vmatprep.subr.mxu0 0.0
    %1403 = vmatpush2.msra.mxu0 0.0
    %1404 = vmatprep.subr.mxu0 0.0
    %1405 = vmatpush2.msra.mxu0 0.0
    %1406 = vmatprep.subr.mxu0 0.0
    %1407 = vmatpush2.msra.mxu0 0.0
    %1408 = vmatprep.subr.mxu0 0.0
    %1409 = vmatpush2.msra.mxu0 0.0
    %1410 = vmatprep.subr.mxu0 0.0
    %1411 = vmatpush2.msra.mxu0 0.0
    %1412 = vmatprep.subr.mxu0 0.0
    %1413 = vmatpush2.msra.mxu0 0.0
    %1414 = vmatprep.subr.mxu0 0.0
    %1415 = vmatpush2.msra.mxu0 0.0
    %1416 = vmatprep.mubr.f32.mxu0 0.0
    %v1417 = vand.u32 %v192, 4294901760
    %v1418 = vsub.f32 %v192, %v1417
    %v1419 = vand.u32 %v1418, 4294901760
    %1420 = vmatmul.mubr.f32.gmra.mxu0 %v1419
    %v1421 = vpop.f32.mrf.mxu0
    %v1422 = vadd.f32 %v1312, %v1421
    %v1423 = vpop.f32.mrf.mxu0
    %v1424 = vadd.f32 %v1314, %v1423
    %1425 = vmatprep.mubr.f32.mxu0 0.0
    %v1426 = vand.u32 %v195, 4294901760
    %v1427 = vsub.f32 %v195, %v1426
    %v1428 = vand.u32 %v1427, 4294901760
    %1429 = vmatmul.mubr.f32.gmra.mxu0 %v1428
    %v1430 = vpop.f32.mrf.mxu0
    %v1431 = vadd.f32 %v1320, %v1430
    %v1432 = vpop.f32.mrf.mxu0
    %v1433 = vadd.f32 %v1322, %v1432
    %1434 = vmatprep.mubr.f32.mxu0 0.0
    %v1435 = vand.u32 %v198, 4294901760
    %v1436 = vsub.f32 %v198, %v1435
    %v1437 = vand.u32 %v1436, 4294901760
    %1438 = vmatmul.mubr.f32.gmra.mxu0 %v1437
    %v1439 = vpop.f32.mrf.mxu0
    %v1440 = vadd.f32 %v1328, %v1439
    %v1441 = vpop.f32.mrf.mxu0
    %v1442 = vadd.f32 %v1330, %v1441
    %1443 = vmatprep.mubr.f32.mxu0 0.0
    %v1444 = vand.u32 %v201, 4294901760
    %v1445 = vsub.f32 %v201, %v1444
    %v1446 = vand.u32 %v1445, 4294901760
    %1447 = vmatmul.mubr.f32.gmra.mxu0 %v1446
    %v1448 = vpop.f32.mrf.mxu0
    %v1449 = vadd.f32 %v1336, %v1448
    %v1450 = vpop.f32.mrf.mxu0
    %v1451 = vadd.f32 %v1338, %v1450
    %1452 = vdwg.mxu0
    %1453 = vmatprep.subr.mxu0 0.0
    %1454 = vmatpush1.msra.mxu0 0.0
    %1455 = vmatprep.subr.mxu0 0.0
    %1456 = vmatpush1.msra.mxu0 0.0
    %1457 = vmatprep.subr.mxu0 0.0
    %1458 = vmatpush1.msra.mxu0 0.0
    %1459 = vmatprep.subr.mxu0 0.0
    %1460 = vmatpush1.msra.mxu0 0.0
    %1461 = vmatprep.subr.mxu0 0.0
    %1462 = vmatpush1.msra.mxu0 0.0
    %1463 = vmatprep.subr.mxu0 0.0
    %1464 = vmatpush1.msra.mxu0 0.0
    %1465 = vmatprep.subr.mxu0 0.0
    %1466 = vmatpush1.msra.mxu0 0.0
    %1467 = vmatprep.subr.mxu0 0.0
    %1468 = vmatpush1.msra.mxu0 0.0
    %1469 = vmatprep.subr.mxu0 0.0
    %1470 = vmatpush1.msra.mxu0 0.0
    %1471 = vmatprep.subr.mxu0 0.0
    %1472 = vmatpush1.msra.mxu0 0.0
    %v1473 = vand.u32 %v167, 4294901760
    %v1474 = vsub.f32 %v167, %v1473
    %v1475 = vand.u32 %v1474, 4294901760
    %1476 = vmatprep.subr.mxu0 %v1475
    %v1477 = vand.u32 %v166, 4294901760
    %v1478 = vsub.f32 %v166, %v1477
    %v1479 = vand.u32 %v1478, 4294901760
    %1480 = vmatpush1.msra.mxu0 %v1479
    %v1481 = vand.u32 %v163, 4294901760
    %v1482 = vsub.f32 %v163, %v1481
    %v1483 = vand.u32 %v1482, 4294901760
    %1484 = vmatprep.subr.mxu0 %v1483
    %v1485 = vand.u32 %v162, 4294901760
    %v1486 = vsub.f32 %v162, %v1485
    %v1487 = vand.u32 %v1486, 4294901760
    %1488 = vmatpush1.msra.mxu0 %v1487
    %v1489 = vand.u32 %v159, 4294901760
    %v1490 = vsub.f32 %v159, %v1489
    %v1491 = vand.u32 %v1490, 4294901760
    %1492 = vmatprep.subr.mxu0 %v1491
    %v1493 = vand.u32 %v158, 4294901760
    %v1494 = vsub.f32 %v158, %v1493
    %v1495 = vand.u32 %v1494, 4294901760
    %1496 = vmatpush1.msra.mxu0 %v1495
    %v1497 = vand.u32 %v155, 4294901760
    %v1498 = vsub.f32 %v155, %v1497
    %v1499 = vand.u32 %v1498, 4294901760
    %1500 = vmatprep.subr.mxu0 %v1499
    %v1501 = vand.u32 %v154, 4294901760
    %v1502 = vsub.f32 %v154, %v1501
    %v1503 = vand.u32 %v1502, 4294901760
    %1504 = vmatpush1.msra.mxu0 %v1503
    %v1505 = vand.u32 %v151, 4294901760
    %v1506 = vsub.f32 %v151, %v1505
    %v1507 = vand.u32 %v1506, 4294901760
    %1508 = vmatprep.subr.mxu0 %v1507
    %v1509 = vand.u32 %v150, 4294901760
    %v1510 = vsub.f32 %v150, %v1509
    %v1511 = vand.u32 %v1510, 4294901760
    %1512 = vmatpush1.msra.mxu0 %v1511
    %v1513 = vand.u32 %v147, 4294901760
    %v1514 = vsub.f32 %v147, %v1513
    %v1515 = vand.u32 %v1514, 4294901760
    %1516 = vmatprep.subr.mxu0 %v1515
    %v1517 = vand.u32 %v146, 4294901760
    %v1518 = vsub.f32 %v146, %v1517
    %v1519 = vand.u32 %v1518, 4294901760
    %1520 = vmatpush1.msra.mxu0 %v1519
    %1521 = vmatprep.subr.mxu0 0.0
    %1522 = vmatpush2.msra.mxu0 0.0
    %1523 = vmatprep.subr.mxu0 0.0
    %1524 = vmatpush2.msra.mxu0 0.0
    %1525 = vmatprep.subr.mxu0 0.0
    %1526 = vmatpush2.msra.mxu0 0.0
    %1527 = vmatprep.subr.mxu0 0.0
    %1528 = vmatpush2.msra.mxu0 0.0
    %1529 = vmatprep.subr.mxu0 0.0
    %1530 = vmatpush2.msra.mxu0 0.0
    %1531 = vmatprep.subr.mxu0 0.0
    %1532 = vmatpush2.msra.mxu0 0.0
    %1533 = vmatprep.subr.mxu0 0.0
    %1534 = vmatpush2.msra.mxu0 0.0
    %1535 = vmatprep.subr.mxu0 0.0
    %1536 = vmatpush2.msra.mxu0 0.0
    %1537 = vmatprep.subr.mxu0 0.0
    %1538 = vmatpush2.msra.mxu0 0.0
    %1539 = vmatprep.subr.mxu0 0.0
    %1540 = vmatpush2.msra.mxu0 0.0
    %1541 = vmatprep.subr.mxu0 0.0
    %1542 = vmatpush2.msra.mxu0 0.0
    %1543 = vmatprep.subr.mxu0 0.0
    %1544 = vmatpush2.msra.mxu0 0.0
    %1545 = vmatprep.subr.mxu0 0.0
    %1546 = vmatpush2.msra.mxu0 0.0
    %1547 = vmatprep.subr.mxu0 0.0
    %1548 = vmatpush2.msra.mxu0 0.0
    %1549 = vmatprep.subr.mxu0 0.0
    %1550 = vmatpush2.msra.mxu0 0.0
    %1551 = vmatprep.subr.mxu0 0.0
    %1552 = vmatpush2.msra.mxu0 0.0
    %1553 = vmatprep.mubr.f32.mxu0 0.0
    %v1554 = vand.u32 %v192, 4294901760
    %1555 = vmatmul.mubr.f32.gmra.mxu0 %v1554
    %v1556 = vpop.f32.mrf.mxu0
    %v1557 = vadd.f32 %v1422, %v1556
    %v1558 = vpop.f32.mrf.mxu0
    %v1559 = vadd.f32 %v1424, %v1558
    %1560 = vmatprep.mubr.f32.mxu0 0.0
    %v1561 = vand.u32 %v195, 4294901760
    %1562 = vmatmul.mubr.f32.gmra.mxu0 %v1561
    %v1563 = vpop.f32.mrf.mxu0
    %v1564 = vadd.f32 %v1431, %v1563
    %v1565 = vpop.f32.mrf.mxu0
    %v1566 = vadd.f32 %v1433, %v1565
    %1567 = vmatprep.mubr.f32.mxu0 0.0
    %v1568 = vand.u32 %v198, 4294901760
    %1569 = vmatmul.mubr.f32.gmra.mxu0 %v1568
    %v1570 = vpop.f32.mrf.mxu0
    %v1571 = vadd.f32 %v1440, %v1570
    %v1572 = vpop.f32.mrf.mxu0
    %v1573 = vadd.f32 %v1442, %v1572
    %1574 = vmatprep.mubr.f32.mxu0 0.0
    %v1575 = vand.u32 %v201, 4294901760
    %1576 = vmatmul.mubr.f32.gmra.mxu0 %v1575
    %v1577 = vpop.f32.mrf.mxu0
    %v1578 = vadd.f32 %v1449, %v1577
    %v1579 = vpop.f32.mrf.mxu0
    %v1580 = vadd.f32 %v1451, %v1579
    %1581 = vdwg.mxu0
    %1582 = vmatprep.subr.mxu0 0.0
    %1583 = vmatpush1.msra.mxu0 0.0
    %1584 = vmatprep.subr.mxu0 0.0
    %1585 = vmatpush1.msra.mxu0 0.0
    %1586 = vmatprep.subr.mxu0 0.0
    %1587 = vmatpush1.msra.mxu0 0.0
    %1588 = vmatprep.subr.mxu0 0.0
    %1589 = vmatpush1.msra.mxu0 0.0
    %1590 = vmatprep.subr.mxu0 0.0
    %1591 = vmatpush1.msra.mxu0 0.0
    %1592 = vmatprep.subr.mxu0 0.0
    %1593 = vmatpush1.msra.mxu0 0.0
    %1594 = vmatprep.subr.mxu0 0.0
    %1595 = vmatpush1.msra.mxu0 0.0
    %1596 = vmatprep.subr.mxu0 0.0
    %1597 = vmatpush1.msra.mxu0 0.0
    %1598 = vmatprep.subr.mxu0 0.0
    %1599 = vmatpush1.msra.mxu0 0.0
    %1600 = vmatprep.subr.mxu0 0.0
    %1601 = vmatpush1.msra.mxu0 0.0
    %v1602 = vand.u32 %v167, 4294901760
    %1603 = vmatprep.subr.mxu0 %v1602
    %v1604 = vand.u32 %v166, 4294901760
    %1605 = vmatpush1.msra.mxu0 %v1604
    %v1606 = vand.u32 %v163, 4294901760
    %1607 = vmatprep.subr.mxu0 %v1606
    %v1608 = vand.u32 %v162, 4294901760
    %1609 = vmatpush1.msra.mxu0 %v1608
    %v1610 = vand.u32 %v159, 4294901760
    %1611 = vmatprep.subr.mxu0 %v1610
    %v1612 = vand.u32 %v158, 4294901760
    %1613 = vmatpush1.msra.mxu0 %v1612
    %v1614 = vand.u32 %v155, 4294901760
    %1615 = vmatprep.subr.mxu0 %v1614
    %v1616 = vand.u32 %v154, 4294901760
    %1617 = vmatpush1.msra.mxu0 %v1616
    %v1618 = vand.u32 %v151, 4294901760
    %1619 = vmatprep.subr.mxu0 %v1618
    %v1620 = vand.u32 %v150, 4294901760
    %1621 = vmatpush1.msra.mxu0 %v1620
    %v1622 = vand.u32 %v147, 4294901760
    %1623 = vmatprep.subr.mxu0 %v1622
    %v1624 = vand.u32 %v146, 4294901760
    %1625 = vmatpush1.msra.mxu0 %v1624
    %1626 = vmatprep.subr.mxu0 0.0
    %1627 = vmatpush2.msra.mxu0 0.0
    %1628 = vmatprep.subr.mxu0 0.0
    %1629 = vmatpush2.msra.mxu0 0.0
    %1630 = vmatprep.subr.mxu0 0.0
    %1631 = vmatpush2.msra.mxu0 0.0
    %1632 = vmatprep.subr.mxu0 0.0
    %1633 = vmatpush2.msra.mxu0 0.0
    %1634 = vmatprep.subr.mxu0 0.0
    %1635 = vmatpush2.msra.mxu0 0.0
    %1636 = vmatprep.subr.mxu0 0.0
    %1637 = vmatpush2.msra.mxu0 0.0
    %1638 = vmatprep.subr.mxu0 0.0
    %1639 = vmatpush2.msra.mxu0 0.0
    %1640 = vmatprep.subr.mxu0 0.0
    %1641 = vmatpush2.msra.mxu0 0.0
    %1642 = vmatprep.subr.mxu0 0.0
    %1643 = vmatpush2.msra.mxu0 0.0
    %1644 = vmatprep.subr.mxu0 0.0
    %1645 = vmatpush2.msra.mxu0 0.0
    %1646 = vmatprep.subr.mxu0 0.0
    %1647 = vmatpush2.msra.mxu0 0.0
    %1648 = vmatprep.subr.mxu0 0.0
    %1649 = vmatpush2.msra.mxu0 0.0
    %1650 = vmatprep.subr.mxu0 0.0
    %1651 = vmatpush2.msra.mxu0 0.0
    %1652 = vmatprep.subr.mxu0 0.0
    %1653 = vmatpush2.msra.mxu0 0.0
    %1654 = vmatprep.subr.mxu0 0.0
    %1655 = vmatpush2.msra.mxu0 0.0
    %1656 = vmatprep.subr.mxu0 0.0
    %1657 = vmatpush2.msra.mxu0 0.0
    %1658 = vmatprep.mubr.f32.mxu0 0.0
    %v1659 = vand.u32 %v192, 4294901760
    %1660 = vmatmul.mubr.f32.gmra.mxu0 %v1659
    %v1661 = vpop.f32.mrf.mxu0
    %v1662 = vadd.f32 %v1557, %v1661
    %v1663 = vpop.f32.mrf.mxu0
    %v1664 = vadd.f32 %v1559, %v1663
    %1665 = vmatprep.mubr.f32.mxu0 0.0
    %v1666 = vand.u32 %v195, 4294901760
    %1667 = vmatmul.mubr.f32.gmra.mxu0 %v1666
    %v1668 = vpop.f32.mrf.mxu0
    %v1669 = vadd.f32 %v1564, %v1668
    %v1670 = vpop.f32.mrf.mxu0
    %v1671 = vadd.f32 %v1566, %v1670
    %1672 = vmatprep.mubr.f32.mxu0 0.0
    %v1673 = vand.u32 %v198, 4294901760
    %1674 = vmatmul.mubr.f32.gmra.mxu0 %v1673
    %v1675 = vpop.f32.mrf.mxu0
    %v1676 = vadd.f32 %v1571, %v1675
    %v1677 = vpop.f32.mrf.mxu0
    %v1678 = vadd.f32 %v1573, %v1677
    %1679 = vmatprep.mubr.f32.mxu0 0.0
    %v1680 = vand.u32 %v201, 4294901760
    %1681 = vmatmul.mubr.f32.gmra.mxu0 %v1680
    %v1682 = vpop.f32.mrf.mxu0
    %v1683 = vadd.f32 %v1578, %v1682
    %v1684 = vpop.f32.mrf.mxu0
    %v1685 = vadd.f32 %v1580, %v1684
    %1686 = vdwg.mxu0
    %v1687 = vmax.f32 %v920, 0.0
    %v1688 = vmax.f32 %v922, 0.0
    %v1689 = vmax.f32 %v1662, 0.0
    %v1690 = vmax.f32 %v1664, 0.0
    %v1691 = vmax.f32 %v927, 0.0
    %v1692 = vmax.f32 %v929, 0.0
    %v1693 = vmax.f32 %v1669, 0.0
    %v1694 = vmax.f32 %v1671, 0.0
    %v1695 = vmax.f32 %v934, 0.0
    %v1696 = vmax.f32 %v936, 0.0
    %v1697 = vmax.f32 %v1676, 0.0
    %v1698 = vmax.f32 %v1678, 0.0
    %v1699 = vmax.f32 %v941, 0.0
    %v1700 = vmax.f32 %v943, 0.0
    %v1701 = vmax.f32 %v1683, 0.0
    %v1702 = vmax.f32 %v1685, 0.0
    %v1703 = vmax.f32 %v1687, %v1695
    %v1704 = vmax.f32 %v1688, %v1696
    %v1705 = vmax.f32 %v1689, %v1697
    %v1706 = vmax.f32 %v1690, %v1698
    %v1707 = vmax.f32 %v1691, %v1699
    %v1708 = vmax.f32 %v1692, %v1700
    %v1709 = vmax.f32 %v1693, %v1701
    %v1710 = vmax.f32 %v1694, %v1702
    %v1711 = vmax.f32 %v1703, %v1705
    %v1712 = vmax.f32 %v1704, %v1706
    %v1713 = vmax.f32 %v1707, %v1709
    %v1714 = vmax.f32 %v1708, %v1710
    %v1715 = vld [vmem:[#allocation9] sm:$0xff]
    %v1716 = vld [vmem:[#allocation9 + $0x8] sm:$0xff]
    %v1717 = vld [vmem:[#allocation9 + $0x10] sm:$0xff]
    %v1718 = vld [vmem:[#allocation9 + $0x18] sm:$0xff]
    %v1719 = vmul.f32 %v1711, %v1715
    %v1720 = vmul.f32 %v1712, %v1716
    %v1721 = vmul.f32 %v1713, %v1717
    %v1722 = vmul.f32 %v1714, %v1718
    %v1723 = vadd.f32 %v1719, %v1720
    %1724 = vadd.xlane.f32.xlu0 %v1723
    %v1725 = vpop.xlane.xlu0 %1724
    %v1726 = vadd.f32 %v1721, %v1722
    %1727 = vadd.xlane.f32.xlu0 %v1726
    %v1728 = vpop.xlane.xlu0 %1727
    %v1729 = vld [vmem:[#allocation9 + $0x20] sm:$0xff]
    %v1730 = vld [vmem:[#allocation9 + $0x28] sm:$0xff]
    %v1731 = vld [vmem:[#allocation9 + $0x30] sm:$0xff]
    %v1732 = vld [vmem:[#allocation9 + $0x38] sm:$0xff]
    %v1733 = vmul.f32 %v1711, %v1729
    %v1734 = vmul.f32 %v1712, %v1730
    %v1735 = vmul.f32 %v1713, %v1731
    %v1736 = vmul.f32 %v1714, %v1732
    %v1737 = vadd.f32 %v1733, %v1734
    %1738 = vadd.xlane.f32.xlu0 %v1737
    %v1739 = vpop.xlane.xlu0 %1738
    %v1740 = vadd.f32 %v1735, %v1736
    %1741 = vadd.xlane.f32.xlu0 %v1740
    %v1742 = vpop.xlane.xlu0 %1741
    %vm1743 = vcmask 7168
    %v1744 = vsel %vm1743, %v1725, %v1739
    %v1745 = vsel %vm1743, %v1728, %v1742
    %vm1746 = vcmask 15360
    %v1747 = vsel %vm1746, %v1744, 0.0
    %v1748 = vrot.slane %v1747, 4
    %v1749 = vadd.f32 %v1747, %v1748
    %v1750 = vrot.slane %v1749, 2
    %v1751 = vadd.f32 %v1749, %v1750
    %v1752 = vrot.slane %v1751, 1
    %v1753 = vadd.f32 %v1751, %v1752
    %v1754 = vsel %vm1746, %v1745, 0.0
    %v1755 = vrot.slane %v1754, 4
    %v1756 = vadd.f32 %v1754, %v1755
    %v1757 = vrot.slane %v1756, 2
    %v1758 = vadd.f32 %v1756, %v1757
    %v1759 = vrot.slane %v1758, 1
    %v1760 = vadd.f32 %v1758, %v1759
    %vm1761 = vcmask 1040384
    %v1762 = vsel %vm1761, %v1753, %v1760
    %v1763 = vld [vmem:[%s4] sm:$0x1]
    %v1765 = vlaneseq
    %v1766 = vshrl.u32 %v1765, 7
    %v1767 = vsub.s32 0, %v1766
    %v1768 = vrot.slane %v1763, %v1767
    %v1770 = vadd.f32 %v1762, %v1768
    %vm1771 = vcmask 9216
    %1772 = vst.msk [vmem:[#allocation11] sm:$0x3] %vm1771, %v1770
    // Predicated region
    $region38: #{medical_cnn_forward.1} parent=1 // pred_check
      _
    $region39: #{medical_cnn_forward.1} parent=1 // pred_check_branch
      %1774 = sbr.rel (0) target = $region41
    $region40: #{medical_cnn_forward.1} parent=1 // pred_region
      %s1776 = ssub.s32 32, 32
      %1777 = vsyncadd [#allocation5], %s1776
      %s1779 = sshll.u32 [#allocation11], 4
      %s1780 = int_to_ptr.vmem [resolvable:$true] %s1779
      %1782 = dma.vmem_to_hbm [thread:$0]  %s1780, 32, %s5, [#allocation5]
    $region41: #{medical_cnn_forward.1} parent=1 // pred_fallthru
      _
    // Predicated region
    $region42: #{medical_cnn_forward.1} parent=1 // pred_check
      _
    $region43: #{medical_cnn_forward.1} parent=1 // pred_check_branch
      %1784 = sbr.rel (0) target = $region45
    $region44: #{medical_cnn_forward.1} parent=1 // pred_region
      %1785 = dma.done [#allocation5], 32
    $region45: #{medical_cnn_forward.1} parent=1 // pred_fallthru
      _
    %1786 = vsyncpa [#allocation4], 1
    %1787 = vsyncpa [#allocation7], 1
    %1788 = vsyncpa [#allocation10], 1
    %1789 = vsyncpa [#allocation5], 1

</llo_original>
